<compile_context>
chip_gen: v7x
topology: tpu7x:2x2x1
jax: 0.10.0
libtpu: 0.0.40
codegen_flags: <defaults>
</compile_context>

<pallas_src>
import jax
import jax.numpy as jnp
from jax.experimental import pallas as pl
from jax.experimental.pallas import tpu as pltpu

IMAGE_SIZE = (1, 28, 28)
LATENT = 784
# True (PyTorch) layer dims: in -> ... -> out
LAYER_DIMS = [784, 64, 128, 256, 512, 784]
# Lane-padded dims used inside the kernel (multiples of 128 on the out axis).
PAD_IN = [784, 128, 128, 256, 512]
PAD_OUT = [128, 128, 256, 512, 896]
BIAS_OFFSETS = [0, 128, 256, 512, 1024]      # cumulative sums of PAD_OUT
BIAS_TOTAL = 1920                            # sum(PAD_OUT)
QUANT_LAYERS = (3, 4)                        # int8 storage for W4, W5


def _round_up(x, m):
    return ((x + m - 1) // m) * m


def _default_batch_tile():
    """128 on v5e (vreg pressure / 128-wide MXU), 256 on v6e/v7x."""
    try:
        kind = jax.devices()[0].device_kind.lower()
    except Exception:
        return 128
    return 128 if "v5" in kind else 256


def _generator_kernel(z_ref,
                      w1_ref, w2_ref, w3_ref, w4_ref, w5_ref,
                      slab_ref, out_ref):
    """Whole MLP forward for one batch tile, fully VMEM-resident.

    Weights are bf16 (small layers) or int8 + per-channel scale (large layers);
    the MXU always runs bf16 x bf16 with f32 accumulation.  Bias add, dequant
    scale, ReLU and tanh are all f32 (v5e has no bf16 VPU/EUP).
    """

    def linear(x_f32, w_ref, layer):
        off = BIAS_OFFSETS[layer]
        n = PAD_OUT[layer]
        w = w_ref[...]
        if jnp.issubdtype(w.dtype, jnp.integer):
            w = w.astype(jnp.bfloat16)               # cheap VPU dequant-cast
        y = jnp.dot(x_f32.astype(jnp.bfloat16), w,
                    preferred_element_type=jnp.float32)
        if layer in QUANT_LAYERS:
            y = y * slab_ref[1:2, off:off + n]       # per-channel dequant scale
        return y + slab_ref[0:1, off:off + n]        # (1, n) broadcasts over rows

    h = z_ref[...]                                    # (tb, 784) f32
    h = jnp.maximum(linear(h, w1_ref, 0), 0.0)        # (tb, 128)
    h = jnp.maximum(linear(h, w2_ref, 1), 0.0)        # (tb, 128)
    h = jnp.maximum(linear(h, w3_ref, 2), 0.0)        # (tb, 256)
    h = jnp.maximum(linear(h, w4_ref, 3), 0.0)        # (tb, 512)
    out_ref[...] = jnp.tanh(linear(h, w5_ref, 4)).astype(out_ref.dtype)  # (tb, 896)


def init_generator_params(key, dtype=jnp.float32):
    """Deterministic synthetic parameters matching the nn.Linear shapes.

    Weights stored as (in_features, out_features) f32 (x @ W + b == PyTorch's
    x @ W.T + b); biases stored 1D (out_features,).
    """
    params = []
    for i in range(len(LAYER_DIMS) - 1):
        fan_in, fan_out = LAYER_DIMS[i], LAYER_DIMS[i + 1]
        key, kw, kb = jax.random.split(key, 3)
        bound = 1.0 / jnp.sqrt(fan_in)
        w = jax.random.uniform(kw, (fan_in, fan_out), dtype, -bound, bound)
        b = jax.random.uniform(kb, (fan_out,), dtype, -bound, bound)
        params.append((w, b))
    return params


def pack_generator_params(params):
    """Pad weights to lane-dense shapes and pack bias+scale into one f32 slab.

    Small layers -> bf16 weights; large layers (QUANT_LAYERS) -> int8 weights
    with a per-output-channel scale.  Zero padding is inert: padded output
    columns have zero weights and zero bias (-> ReLU 0), and the matching
    padded input rows of the next weight are zero.
    """
    weights, biases, scales = [], [], []
    for i, ((w, b), in_p, out_p) in enumerate(zip(params, PAD_IN, PAD_OUT)):
        fan_in, fan_out = w.shape
        w32 = w.astype(jnp.float32)
        if i in QUANT_LAYERS:
            col_max = jnp.max(jnp.abs(w32), axis=0)
            s = jnp.where(col_max > 0, col_max / 127.0, 1.0)
            wq = jnp.clip(jnp.round(w32 / s), -127.0, 127.0).astype(jnp.int8)
            w_pad = jnp.zeros((in_p, out_p), jnp.int8)
            w_pad = w_pad.at[:fan_in, :fan_out].set(wq)
            s_pad = jnp.ones((out_p,), jnp.float32).at[:fan_out].set(s)
        else:
            w_pad = jnp.zeros((in_p, out_p), jnp.bfloat16)
            w_pad = w_pad.at[:fan_in, :fan_out].set(w32.astype(jnp.bfloat16))
            s_pad = jnp.ones((out_p,), jnp.float32)
        b_pad = jnp.zeros((out_p,), jnp.float32).at[:fan_out].set(
            b.astype(jnp.float32))
        weights.append(w_pad)
        biases.append(b_pad)
        scales.append(s_pad)
    # Row 0: biases, row 1: per-channel dequant scales. Lane-dense (2, 1920).
    slab = jnp.stack([jnp.concatenate(biases), jnp.concatenate(scales)])
    return tuple(weights), slab


def generator_reference(z, params):
    """Pure-JAX f32 reference of the PyTorch forward pass."""
    h = z
    last = len(params) - 1
    for i, (w, b) in enumerate(params):
        h = h @ w + b
        h = jnp.tanh(h) if i == last else jnp.maximum(h, 0.0)
    return h.reshape(z.shape[0], *IMAGE_SIZE)


def generator_forward(z, packed_params, *, max_batch_tile=None):
    weights, slab = packed_params
    batch = z.shape[0]
    if max_batch_tile is None:
        max_batch_tile = _default_batch_tile()

    # Pad batch to a multiple of 8; only tile (and thereby allow TC sharding)
    # once the batch exceeds max_batch_tile, where per-tile activation bytes
    # outweigh the duplicated resident-weight DMA.
    b8 = _round_up(batch, 8)
    tb = b8 if b8 <= max_batch_tile else max_batch_tile
    b_pad = _round_up(b8, tb)
    if b_pad != batch:
        z = jnp.pad(z, ((0, b_pad - batch), (0, 0)))

    grid = (b_pad // tb,)

    in_specs = [pl.BlockSpec((tb, LATENT), lambda i: (i, 0))]
    for w in weights:
        in_specs.append(pl.BlockSpec(w.shape, lambda i: (0, 0)))  # VMEM-resident
    in_specs.append(pl.BlockSpec((2, BIAS_TOTAL), lambda i: (0, 0)))
    out_spec = pl.BlockSpec((tb, PAD_OUT[-1]), lambda i: (i, 0))

    flops = 2 * b_pad * sum(a * b for a, b in zip(PAD_IN, PAD_OUT))
    bytes_accessed = (
        sum(int(w.size) * w.dtype.itemsize for w in weights)   # bf16 + int8
        + int(slab.size) * 4
        + b_pad * (LATENT + PAD_OUT[-1]) * 4)                  # z in + out
    transcendentals = b_pad * PAD_OUT[-1]                      # tanh

    out = pl.pallas_call(
        _generator_kernel,
        out_shape=jax.ShapeDtypeStruct((b_pad, PAD_OUT[-1]), z.dtype),
        grid=grid,
        in_specs=in_specs,
        out_specs=out_spec,
        compiler_params=pltpu.CompilerParams(
            dimension_semantics=("parallel",)),
        cost_estimate=pl.CostEstimate(
            flops=flops,
            transcendentals=transcendentals,
            bytes_accessed=bytes_accessed),
    )(z, *weights, slab)

    # Strip batch/feature padding and reshape to NCHW image, as in PyTorch.
    return out[:batch, :LAYER_DIMS[-1]].reshape(batch, *IMAGE_SIZE)


if __name__ == "__main__":
    key = jax.random.PRNGKey(0)
    k_params, k_z = jax.random.split(key)

    params = init_generator_params(k_params)
    packed = pack_generator_params(params)

    # Matches z = torch.randn(12, 784) from the reference script.
    z = jax.random.normal(k_z, (12, LATENT), dtype=jnp.float32)

    image = jax.jit(generator_forward)(z, packed)
    jax.block_until_ready(image)

    assert image.shape == (12, 1, 28, 28), image.shape
    assert image.dtype == jnp.float32
    # Tanh output must lie in [-1, 1].
    assert bool(jnp.all(jnp.abs(image) <= 1.0))

    # Tolerance check against the pure-JAX f32 reference (covers bf16 matmul
    # inputs and int8 per-channel quantization of W4/W5).
    ref = generator_reference(z, params)
    max_err = float(jnp.max(jnp.abs(image - ref)))
    assert max_err < 4e-2, f"max abs error vs f32 reference: {max_err}"

    print("KERNEL_OK")
</pallas_src>

<mosaic_0001>
module attributes {stable_mosaic.version = 11 : i64} {
  func.func @_generator_kernel(%arg0: i32, %arg1: memref<16x784xf32, #tpu.memory_space<vmem>>, %arg2: memref<784x128xbf16, #tpu.memory_space<vmem>>, %arg3: memref<128x128xbf16, #tpu.memory_space<vmem>>, %arg4: memref<128x256xbf16, #tpu.memory_space<vmem>>, %arg5: memref<256x512xi8, #tpu.memory_space<vmem>>, %arg6: memref<512x896xi8, #tpu.memory_space<vmem>>, %arg7: memref<2x1920xf32, #tpu.memory_space<vmem>>, %arg8: memref<16x896xf32, #tpu.memory_space<vmem>>) attributes {dimension_semantics = [#tpu.dimension_semantics<parallel>], iteration_bounds = array<i64: 1>, scalar_prefetch = 0 : i64, scratch_operands = 0 : i64, tpu.core_type = #tpu.core_type<tc>, window_params = [{transform_indices = @transform_0, window_bounds = array<i64: 16, 784>}, {pipeline_mode = #tpu.pipeline_mode<synchronous>, transform_indices = @transform_1, window_bounds = array<i64: 784, 128>}, {pipeline_mode = #tpu.pipeline_mode<synchronous>, transform_indices = @transform_2, window_bounds = array<i64: 128, 128>}, {pipeline_mode = #tpu.pipeline_mode<synchronous>, transform_indices = @transform_3, window_bounds = array<i64: 128, 256>}, {pipeline_mode = #tpu.pipeline_mode<synchronous>, transform_indices = @transform_4, window_bounds = array<i64: 256, 512>}, {pipeline_mode = #tpu.pipeline_mode<synchronous>, transform_indices = @transform_5, window_bounds = array<i64: 512, 896>}, {pipeline_mode = #tpu.pipeline_mode<synchronous>, transform_indices = @transform_6, window_bounds = array<i64: 2, 1920>}, {transform_indices = @transform_7, window_bounds = array<i64: 16, 896>}]} {
    %c0 = arith.constant 0 : index
    %c0_0 = arith.constant 0 : index
    %0 = vector.load %arg1[%c0, %c0_0] : memref<16x784xf32, #tpu.memory_space<vmem>>, vector<16x784xf32>
    %c0_1 = arith.constant 0 : index
    %c0_2 = arith.constant 0 : index
    %1 = vector.load %arg2[%c0_1, %c0_2] : memref<784x128xbf16, #tpu.memory_space<vmem>>, vector<784x128xbf16>
    %2 = arith.truncf %0 : vector<16x784xf32> to vector<16x784xbf16>
    %cst = arith.constant dense<0.000000e+00> : vector<16x128xf32>
    %3 = tpu.matmul %2, %1, %cst {dimension_numbers = #tpu.dot_dimension_numbers<[1], [0], [0], [1], [0, 0, 1, 1], [], []>} : vector<16x784xbf16>, vector<784x128xbf16>, vector<16x128xf32> -> vector<16x128xf32>
    %c0_3 = arith.constant 0 : index
    %c0_4 = arith.constant 0 : index
    %4 = vector.load %arg7[%c0_3, %c0_4] : memref<2x1920xf32, #tpu.memory_space<vmem>>, vector<1x128xf32>
    %5 = vector.broadcast %4 : vector<1x128xf32> to vector<16x128xf32>
    %6 = arith.addf %3, %5 : vector<16x128xf32>
    %cst_5 = arith.constant 0.000000e+00 : f32
    %7 = vector.broadcast %cst_5 : f32 to vector<16x128xf32>
    %8 = arith.maximumf %6, %7 : vector<16x128xf32>
    %c0_6 = arith.constant 0 : index
    %c0_7 = arith.constant 0 : index
    %9 = vector.load %arg3[%c0_6, %c0_7] : memref<128x128xbf16, #tpu.memory_space<vmem>>, vector<128x128xbf16>
    %10 = arith.truncf %8 : vector<16x128xf32> to vector<16x128xbf16>
    %cst_8 = arith.constant dense<0.000000e+00> : vector<16x128xf32>
    %11 = tpu.matmul %10, %9, %cst_8 {dimension_numbers = #tpu.dot_dimension_numbers<[1], [0], [0], [1], [0, 0, 1, 1], [], []>} : vector<16x128xbf16>, vector<128x128xbf16>, vector<16x128xf32> -> vector<16x128xf32>
    %c0_9 = arith.constant 0 : index
    %c128 = arith.constant 128 : index
    %12 = vector.load %arg7[%c0_9, %c128] : memref<2x1920xf32, #tpu.memory_space<vmem>>, vector<1x128xf32>
    %13 = vector.broadcast %12 : vector<1x128xf32> to vector<16x128xf32>
    %14 = arith.addf %11, %13 : vector<16x128xf32>
    %cst_10 = arith.constant 0.000000e+00 : f32
    %15 = vector.broadcast %cst_10 : f32 to vector<16x128xf32>
    %16 = arith.maximumf %14, %15 : vector<16x128xf32>
    %c0_11 = arith.constant 0 : index
    %c0_12 = arith.constant 0 : index
    %17 = vector.load %arg4[%c0_11, %c0_12] : memref<128x256xbf16, #tpu.memory_space<vmem>>, vector<128x256xbf16>
    %18 = arith.truncf %16 : vector<16x128xf32> to vector<16x128xbf16>
    %cst_13 = arith.constant dense<0.000000e+00> : vector<16x256xf32>
    %19 = tpu.matmul %18, %17, %cst_13 {dimension_numbers = #tpu.dot_dimension_numbers<[1], [0], [0], [1], [0, 0, 1, 1], [], []>} : vector<16x128xbf16>, vector<128x256xbf16>, vector<16x256xf32> -> vector<16x256xf32>
    %c0_14 = arith.constant 0 : index
    %c256 = arith.constant 256 : index
    %20 = vector.load %arg7[%c0_14, %c256] : memref<2x1920xf32, #tpu.memory_space<vmem>>, vector<1x256xf32>
    %21 = vector.broadcast %20 : vector<1x256xf32> to vector<16x256xf32>
    %22 = arith.addf %19, %21 : vector<16x256xf32>
    %cst_15 = arith.constant 0.000000e+00 : f32
    %23 = vector.broadcast %cst_15 : f32 to vector<16x256xf32>
    %24 = arith.maximumf %22, %23 : vector<16x256xf32>
    %c0_16 = arith.constant 0 : index
    %c0_17 = arith.constant 0 : index
    %25 = vector.load %arg5[%c0_16, %c0_17] : memref<256x512xi8, #tpu.memory_space<vmem>>, vector<256x512xi8>
    %26 = arith.sitofp %25 : vector<256x512xi8> to vector<256x512xbf16>
    %27 = arith.truncf %24 : vector<16x256xf32> to vector<16x256xbf16>
    %cst_18 = arith.constant dense<0.000000e+00> : vector<16x512xf32>
    %28 = tpu.matmul %27, %26, %cst_18 {dimension_numbers = #tpu.dot_dimension_numbers<[1], [0], [0], [1], [0, 0, 1, 1], [], []>} : vector<16x256xbf16>, vector<256x512xbf16>, vector<16x512xf32> -> vector<16x512xf32>
    %c1 = arith.constant 1 : index
    %c512 = arith.constant 512 : index
    %29 = vector.load %arg7[%c1, %c512] : memref<2x1920xf32, #tpu.memory_space<vmem>>, vector<1x512xf32>
    %30 = vector.broadcast %29 : vector<1x512xf32> to vector<16x512xf32>
    %31 = arith.mulf %28, %30 : vector<16x512xf32>
    %c0_19 = arith.constant 0 : index
    %c512_20 = arith.constant 512 : index
    %32 = vector.load %arg7[%c0_19, %c512_20] : memref<2x1920xf32, #tpu.memory_space<vmem>>, vector<1x512xf32>
    %33 = vector.broadcast %32 : vector<1x512xf32> to vector<16x512xf32>
    %34 = arith.addf %31, %33 : vector<16x512xf32>
    %cst_21 = arith.constant 0.000000e+00 : f32
    %35 = vector.broadcast %cst_21 : f32 to vector<16x512xf32>
    %36 = arith.maximumf %34, %35 : vector<16x512xf32>
    %c0_22 = arith.constant 0 : index
    %c0_23 = arith.constant 0 : index
    %37 = vector.load %arg6[%c0_22, %c0_23] : memref<512x896xi8, #tpu.memory_space<vmem>>, vector<512x896xi8>
    %38 = arith.sitofp %37 : vector<512x896xi8> to vector<512x896xbf16>
    %39 = arith.truncf %36 : vector<16x512xf32> to vector<16x512xbf16>
    %cst_24 = arith.constant dense<0.000000e+00> : vector<16x896xf32>
    %40 = tpu.matmul %39, %38, %cst_24 {dimension_numbers = #tpu.dot_dimension_numbers<[1], [0], [0], [1], [0, 0, 1, 1], [], []>} : vector<16x512xbf16>, vector<512x896xbf16>, vector<16x896xf32> -> vector<16x896xf32>
    %c1_25 = arith.constant 1 : index
    %c1024 = arith.constant 1024 : index
    %41 = vector.load %arg7[%c1_25, %c1024] : memref<2x1920xf32, #tpu.memory_space<vmem>>, vector<1x896xf32>
    %42 = vector.broadcast %41 : vector<1x896xf32> to vector<16x896xf32>
    %43 = arith.mulf %40, %42 : vector<16x896xf32>
    %c0_26 = arith.constant 0 : index
    %c1024_27 = arith.constant 1024 : index
    %44 = vector.load %arg7[%c0_26, %c1024_27] : memref<2x1920xf32, #tpu.memory_space<vmem>>, vector<1x896xf32>
    %45 = vector.broadcast %44 : vector<1x896xf32> to vector<16x896xf32>
    %46 = arith.addf %43, %45 : vector<16x896xf32>
    %47 = math.tanh %46 : vector<16x896xf32>
    %c0_28 = arith.constant 0 : index
    %c0_29 = arith.constant 0 : index
    %48 = vector.load %arg8[%c0_28, %c0_29] : memref<16x896xf32, #tpu.memory_space<vmem>>, vector<16x896xf32>
    tpu.vector_store %arg8[%c0_28, %c0_29], %47 {strides = array<i32>} : memref<16x896xf32, #tpu.memory_space<vmem>>, vector<16x896xf32>,
    return
  }
  func.func @transform_0(%arg0: i32) -> (i32, i32) {
    %c0_i32 = arith.constant 0 : i32
    %c0_i32_0 = arith.constant 0 : i32
    return %arg0, %c0_i32 : i32, i32
  }
  func.func @transform_1(%arg0: i32) -> (i32, i32) {
    %c0_i32 = arith.constant 0 : i32
    %c0_i32_0 = arith.constant 0 : i32
    %c0_i32_1 = arith.constant 0 : i32
    return %c0_i32, %c0_i32_0 : i32, i32
  }
  func.func @transform_2(%arg0: i32) -> (i32, i32) {
    %c0_i32 = arith.constant 0 : i32
    %c0_i32_0 = arith.constant 0 : i32
    %c0_i32_1 = arith.constant 0 : i32
    return %c0_i32, %c0_i32_0 : i32, i32
  }
  func.func @transform_3(%arg0: i32) -> (i32, i32) {
    %c0_i32 = arith.constant 0 : i32
    %c0_i32_0 = arith.constant 0 : i32
    %c0_i32_1 = arith.constant 0 : i32
    return %c0_i32, %c0_i32_0 : i32, i32
  }
  func.func @transform_4(%arg0: i32) -> (i32, i32) {
    %c0_i32 = arith.constant 0 : i32
    %c0_i32_0 = arith.constant 0 : i32
    %c0_i32_1 = arith.constant 0 : i32
    return %c0_i32, %c0_i32_0 : i32, i32
  }
  func.func @transform_5(%arg0: i32) -> (i32, i32) {
    %c0_i32 = arith.constant 0 : i32
    %c0_i32_0 = arith.constant 0 : i32
    %c0_i32_1 = arith.constant 0 : i32
    return %c0_i32, %c0_i32_0 : i32, i32
  }
  func.func @transform_6(%arg0: i32) -> (i32, i32) {
    %c0_i32 = arith.constant 0 : i32
    %c0_i32_0 = arith.constant 0 : i32
    %c0_i32_1 = arith.constant 0 : i32
    return %c0_i32, %c0_i32_0 : i32, i32
  }
  func.func @transform_7(%arg0: i32) -> (i32, i32) {
    %c0_i32 = arith.constant 0 : i32
    %c0_i32_0 = arith.constant 0 : i32
    return %arg0, %c0_i32 : i32, i32
  }
}

</mosaic_0001>

<llo_original>
// kernel: generator_forward.1
$region0: #{generator_forward.1}
  #allocation0 [shape = 'u32[]', space=smem, size = 0x4, offset = 0x4, fixed_abs, tag = 'smem constant byte address 0x4 - core index']
  #allocation1 [shape = 'u32[144,128]{1,0:T(1,128)}', space=vmem, size = 0x12000, scoped, tag = 'internal scratch']
  %s0 = inlined_call_operand.vmem [shape: f32[16,784], index: 0, kind: input, shape index: {}]
  %s1 = inlined_call_operand.hbm [shape: bf16[784,128], index: 1, kind: input, shape index: {}]
  %s2 = inlined_call_operand.vmem [shape: bf16[128,128], index: 2, kind: input, shape index: {}]
  %s3 = inlined_call_operand.vmem [shape: bf16[128,256], index: 3, kind: input, shape index: {}]
  %s4 = inlined_call_operand.hbm [shape: s8[256,512], index: 4, kind: input, shape index: {}]
  %s5 = inlined_call_operand.hbm [shape: s8[512,896], index: 5, kind: input, shape index: {}]
  %s6 = inlined_call_operand.vmem [shape: f32[2,1920], index: 6, kind: input, shape index: {}]
  %s7 = inlined_call_operand.vmem [shape: f32[16,896], index: 7, kind: output, shape index: {}]
  %s8 = sld [smem:[#allocation0]]
  $region50: #{generator_forward.1} parent=0
    _
  %s10 = ssub.s32 1, %s8
  %s11 = scalar_select 0, %s10, %s8
  $region1: #{generator_forward.1} parent=0
    #allocation2 [shape = 'u8[200704]{0}', space=vmem, size = 0x31000, scoped, tag = 'input window, operand 1, single buffered']
    #allocation3 [shape = 's32[1]{0}', space=sflag, size = 0x4, scoped, tag = 'scoped memory for generator_forward.1']
    #allocation4 [shape = 'u8[131072]{0}', space=vmem, size = 0x20000, scoped, tag = 'input window, operand 4, single buffered']
    #allocation5 [shape = 's32[1]{0}', space=sflag, size = 0x4, scoped, tag = 'scoped memory for generator_forward.1']
    #allocation6 [shape = 'u8[458752]{0}', space=vmem, size = 0x70000, scoped, tag = 'input window, operand 5, single buffered']
    %12 = vsyncpa [#allocation3], 0
    %13 = vsyncpa [#allocation5], 0
    // Predicated region
    $region2: #{generator_forward.1} parent=1 // pred_check
      _
    $region3: #{generator_forward.1} parent=1 // pred_check_branch
      %15 = sbr.rel (0) target = $region5
    $region4: #{generator_forward.1} parent=1 // pred_region
      _
    $region5: #{generator_forward.1} parent=1 // pred_fallthru
      _
    // Predicated region
    $region6: #{generator_forward.1} parent=1 // pred_check
      _
    $region7: #{generator_forward.1} parent=1 // pred_check_branch
      %17 = sbr.rel (0) target = $region9
    $region8: #{generator_forward.1} parent=1 // pred_region
      %s19 = ssub.s32 6272, 6272
      %20 = vsyncadd [#allocation3], %s19
      %s21 = sshll.u32 [#allocation2], 4
      %s22 = int_to_ptr.vmem [resolvable:$true] %s21
      %27 = dma.hbm_to_vmem [thread:$0]  %s1, 6272, %s22, [#allocation3], 64, 64, 4
    $region9: #{generator_forward.1} parent=1 // pred_fallthru
      _
    // Predicated region
    $region10: #{generator_forward.1} parent=1 // pred_check
      _
    $region11: #{generator_forward.1} parent=1 // pred_check_branch
      %29 = sbr.rel (0) target = $region13
    $region12: #{generator_forward.1} parent=1 // pred_region
      _
    $region13: #{generator_forward.1} parent=1 // pred_fallthru
      _
    // Predicated region
    $region14: #{generator_forward.1} parent=1 // pred_check
      _
    $region15: #{generator_forward.1} parent=1 // pred_check_branch
      %31 = sbr.rel (0) target = $region17
    $region16: #{generator_forward.1} parent=1 // pred_region
      _
    $region17: #{generator_forward.1} parent=1 // pred_fallthru
      _
    // Predicated region
    $region18: #{generator_forward.1} parent=1 // pred_check
      _
    $region19: #{generator_forward.1} parent=1 // pred_check_branch
      %33 = sbr.rel (0) target = $region21
    $region20: #{generator_forward.1} parent=1 // pred_region
      %s35 = ssub.s32 4096, 4096
      %36 = vsyncadd [#allocation5], %s35
      %s37 = sshll.u32 [#allocation4], 4
      %s38 = int_to_ptr.vmem [resolvable:$true] %s37
      %43 = dma.hbm_to_vmem [thread:$0]  %s4, 4096, %s38, [#allocation5], 512, 512, 32
    $region21: #{generator_forward.1} parent=1 // pred_fallthru
      _
    // Predicated region
    $region22: #{generator_forward.1} parent=1 // pred_check
      _
    $region23: #{generator_forward.1} parent=1 // pred_check_branch
      %45 = sbr.rel (0) target = $region25
    $region24: #{generator_forward.1} parent=1 // pred_region
      %s47 = ssub.s32 14336, 14336
      %48 = vsyncadd [#allocation5], %s47
      %s49 = sshll.u32 [#allocation6], 4
      %s50 = int_to_ptr.vmem [resolvable:$true] %s49
      %55 = dma.hbm_to_vmem [thread:$0]  %s5, 14336, %s50, [#allocation5], 896, 896, 56
    $region25: #{generator_forward.1} parent=1 // pred_fallthru
      _
    // Predicated region
    $region26: #{generator_forward.1} parent=1 // pred_check
      _
    $region27: #{generator_forward.1} parent=1 // pred_check_branch
      %57 = sbr.rel (0) target = $region29
    $region28: #{generator_forward.1} parent=1 // pred_region
      _
    $region29: #{generator_forward.1} parent=1 // pred_fallthru
      _
    // Predicated region
    $region30: #{generator_forward.1} parent=1 // pred_check
      _
    $region31: #{generator_forward.1} parent=1 // pred_check_branch
      %59 = sbr.rel (0) target = $region33
    $region32: #{generator_forward.1} parent=1 // pred_region
      %60 = dma.done [#allocation3], 6272
    $region33: #{generator_forward.1} parent=1 // pred_fallthru
      _
    // Predicated region
    $region34: #{generator_forward.1} parent=1 // pred_check
      _
    $region35: #{generator_forward.1} parent=1 // pred_check_branch
      %62 = sbr.rel (0) target = $region37
    $region36: #{generator_forward.1} parent=1 // pred_region
      %63 = dma.done [#allocation5], 4096
    $region37: #{generator_forward.1} parent=1 // pred_fallthru
      _
    // Predicated region
    $region38: #{generator_forward.1} parent=1 // pred_check
      _
    $region39: #{generator_forward.1} parent=1 // pred_check_branch
      %65 = sbr.rel (0) target = $region41
    $region40: #{generator_forward.1} parent=1 // pred_region
      %66 = dma.done [#allocation5], 14336
    $region41: #{generator_forward.1} parent=1 // pred_fallthru
      _
    %v68 = vld [vmem:[%s0] sm:$0xff]
    %v69 = vld [vmem:[%s0 + $0x8] sm:$0xff]
    %v70 = vld [vmem:[%s0 + $0x10] sm:$0xff]
    %v71 = vld [vmem:[%s0 + $0x18] sm:$0xff]
    %v72 = vld [vmem:[%s0 + $0x20] sm:$0xff]
    %v73 = vld [vmem:[%s0 + $0x28] sm:$0xff]
    %v74 = vld [vmem:[%s0 + $0x30] sm:$0xff]
    %v75 = vld [vmem:[%s0 + $0x38] sm:$0xff]
    %v76 = vld [vmem:[%s0 + $0x40] sm:$0xff]
    %v77 = vld [vmem:[%s0 + $0x48] sm:$0xff]
    %v78 = vld [vmem:[%s0 + $0x50] sm:$0xff]
    %v79 = vld [vmem:[%s0 + $0x58] sm:$0xff]
    %v80 = vld [vmem:[%s0 + $0x60] sm:$0xff]
    %v81 = vld [vmem:[%s0 + $0x68] sm:$0xff]
    %v82 = vld [vmem:[#allocation2] sm:$0xf]
    %v83 = vld [vmem:[#allocation2 + $0x4] sm:$0xf]
    %v84 = vld [vmem:[#allocation2 + $0x8] sm:$0xf]
    %v85 = vld [vmem:[#allocation2 + $0xc] sm:$0xf]
    %v86 = vld [vmem:[#allocation2 + $0x10] sm:$0xf]
    %v87 = vld [vmem:[#allocation2 + $0x14] sm:$0xf]
    %v88 = vld [vmem:[#allocation2 + $0x18] sm:$0xf]
    %v89 = vld [vmem:[#allocation2 + $0x1c] sm:$0xf]
    %v90 = vld [vmem:[#allocation2 + $0x20] sm:$0xf]
    %v91 = vld [vmem:[#allocation2 + $0x24] sm:$0xf]
    %v92 = vld [vmem:[#allocation2 + $0x28] sm:$0xf]
    %v93 = vld [vmem:[#allocation2 + $0x2c] sm:$0xf]
    %v94 = vld [vmem:[#allocation2 + $0x30] sm:$0xf]
    %v95 = vld [vmem:[#allocation2 + $0x34] sm:$0xf]
    %v96 = vld [vmem:[#allocation2 + $0x38] sm:$0xf]
    %v97 = vld [vmem:[#allocation2 + $0x3c] sm:$0xf]
    %v98 = vld [vmem:[#allocation2 + $0x40] sm:$0xf]
    %v99 = vld [vmem:[#allocation2 + $0x44] sm:$0xf]
    %v100 = vld [vmem:[#allocation2 + $0x48] sm:$0xf]
    %v101 = vld [vmem:[#allocation2 + $0x4c] sm:$0xf]
    %v102 = vld [vmem:[#allocation2 + $0x50] sm:$0xf]
    %v103 = vld [vmem:[#allocation2 + $0x54] sm:$0xf]
    %v104 = vld [vmem:[#allocation2 + $0x58] sm:$0xf]
    %v105 = vld [vmem:[#allocation2 + $0x5c] sm:$0xf]
    %v106 = vld [vmem:[#allocation2 + $0x60] sm:$0xf]
    %v107 = vld [vmem:[#allocation2 + $0x64] sm:$0xf]
    %v108 = vld [vmem:[#allocation2 + $0x68] sm:$0xf]
    %v109 = vld [vmem:[#allocation2 + $0x6c] sm:$0xf]
    %v110 = vld [vmem:[#allocation2 + $0x70] sm:$0xf]
    %v111 = vld [vmem:[#allocation2 + $0x74] sm:$0xf]
    %v112 = vld [vmem:[#allocation2 + $0x78] sm:$0xf]
    %v113 = vld [vmem:[#allocation2 + $0x7c] sm:$0xf]
    %v114 = vld [vmem:[#allocation2 + $0x80] sm:$0xf]
    %v115 = vld [vmem:[#allocation2 + $0x84] sm:$0xf]
    %v116 = vld [vmem:[#allocation2 + $0x88] sm:$0xf]
    %v117 = vld [vmem:[#allocation2 + $0x8c] sm:$0xf]
    %v118 = vld [vmem:[#allocation2 + $0x90] sm:$0xf]
    %v119 = vld [vmem:[#allocation2 + $0x94] sm:$0xf]
    %v120 = vld [vmem:[#allocation2 + $0x98] sm:$0xf]
    %v121 = vld [vmem:[#allocation2 + $0x9c] sm:$0xf]
    %v122 = vld [vmem:[#allocation2 + $0xa0] sm:$0xf]
    %v123 = vld [vmem:[#allocation2 + $0xa4] sm:$0xf]
    %v124 = vld [vmem:[#allocation2 + $0xa8] sm:$0xf]
    %v125 = vld [vmem:[#allocation2 + $0xac] sm:$0xf]
    %v126 = vld [vmem:[#allocation2 + $0xb0] sm:$0xf]
    %v127 = vld [vmem:[#allocation2 + $0xb4] sm:$0xf]
    %v128 = vld [vmem:[#allocation2 + $0xb8] sm:$0xf]
    %v129 = vld [vmem:[#allocation2 + $0xbc] sm:$0xf]
    %v130 = vld [vmem:[#allocation2 + $0xc0] sm:$0xf]
    %v131 = vld [vmem:[#allocation2 + $0xc4] sm:$0xf]
    %v132 = vld [vmem:[#allocation2 + $0xc8] sm:$0xf]
    %v133 = vld [vmem:[#allocation2 + $0xcc] sm:$0xf]
    %v134 = vld [vmem:[#allocation2 + $0xd0] sm:$0xf]
    %v135 = vld [vmem:[#allocation2 + $0xd4] sm:$0xf]
    %v136 = vld [vmem:[#allocation2 + $0xd8] sm:$0xf]
    %v137 = vld [vmem:[#allocation2 + $0xdc] sm:$0xf]
    %v138 = vld [vmem:[#allocation2 + $0xe0] sm:$0xf]
    %v139 = vld [vmem:[#allocation2 + $0xe4] sm:$0xf]
    %v140 = vld [vmem:[#allocation2 + $0xe8] sm:$0xf]
    %v141 = vld [vmem:[#allocation2 + $0xec] sm:$0xf]
    %v142 = vld [vmem:[#allocation2 + $0xf0] sm:$0xf]
    %v143 = vld [vmem:[#allocation2 + $0xf4] sm:$0xf]
    %v144 = vld [vmem:[#allocation2 + $0xf8] sm:$0xf]
    %v145 = vld [vmem:[#allocation2 + $0xfc] sm:$0xf]
    %v146 = vld [vmem:[#allocation2 + $0x100] sm:$0xf]
    %v147 = vld [vmem:[#allocation2 + $0x104] sm:$0xf]
    %v148 = vld [vmem:[#allocation2 + $0x108] sm:$0xf]
    %v149 = vld [vmem:[#allocation2 + $0x10c] sm:$0xf]
    %v150 = vld [vmem:[#allocation2 + $0x110] sm:$0xf]
    %v151 = vld [vmem:[#allocation2 + $0x114] sm:$0xf]
    %v152 = vld [vmem:[#allocation2 + $0x118] sm:$0xf]
    %v153 = vld [vmem:[#allocation2 + $0x11c] sm:$0xf]
    %v154 = vld [vmem:[#allocation2 + $0x120] sm:$0xf]
    %v155 = vld [vmem:[#allocation2 + $0x124] sm:$0xf]
    %v156 = vld [vmem:[#allocation2 + $0x128] sm:$0xf]
    %v157 = vld [vmem:[#allocation2 + $0x12c] sm:$0xf]
    %v158 = vld [vmem:[#allocation2 + $0x130] sm:$0xf]
    %v159 = vld [vmem:[#allocation2 + $0x134] sm:$0xf]
    %v160 = vld [vmem:[#allocation2 + $0x138] sm:$0xf]
    %v161 = vld [vmem:[#allocation2 + $0x13c] sm:$0xf]
    %v162 = vld [vmem:[#allocation2 + $0x140] sm:$0xf]
    %v163 = vld [vmem:[#allocation2 + $0x144] sm:$0xf]
    %v164 = vld [vmem:[#allocation2 + $0x148] sm:$0xf]
    %v165 = vld [vmem:[#allocation2 + $0x14c] sm:$0xf]
    %v166 = vld [vmem:[#allocation2 + $0x150] sm:$0xf]
    %v167 = vld [vmem:[#allocation2 + $0x154] sm:$0xf]
    %v168 = vld [vmem:[#allocation2 + $0x158] sm:$0xf]
    %v169 = vld [vmem:[#allocation2 + $0x15c] sm:$0xf]
    %v170 = vld [vmem:[#allocation2 + $0x160] sm:$0xf]
    %v171 = vld [vmem:[#allocation2 + $0x164] sm:$0xf]
    %v172 = vld [vmem:[#allocation2 + $0x168] sm:$0xf]
    %v173 = vld [vmem:[#allocation2 + $0x16c] sm:$0xf]
    %v174 = vld [vmem:[#allocation2 + $0x170] sm:$0xf]
    %v175 = vld [vmem:[#allocation2 + $0x174] sm:$0xf]
    %v176 = vld [vmem:[#allocation2 + $0x178] sm:$0xf]
    %v177 = vld [vmem:[#allocation2 + $0x17c] sm:$0xf]
    %v178 = vld [vmem:[#allocation2 + $0x180] sm:$0xf]
    %v179 = vld [vmem:[#allocation2 + $0x184] sm:$0xf]
    %v180 = vpack.c.bf16 %v75, %v68
    %v181 = vpack.c.bf16 %v76, %v69
    %v182 = vpack.c.bf16 %v77, %v70
    %v183 = vpack.c.bf16 %v78, %v71
    %v184 = vpack.c.bf16 %v79, %v72
    %v185 = vpack.c.bf16 %v80, %v73
    %v186 = vpack.c.bf16 %v81, %v74
    %v187 = vld [vmem:[%s6] sm:$0x1]
    %v188 = vlaneseq
    %v189 = vshrl.u32 %v188, 7
    %v190 = vsub.s32 0, %v189
    %v191 = vrot.slane %v187, %v190
    %v290 = vunpack.c.l.b16 %v82
    %v291 = vunpack.c.l.b16 %v83
    %v292 = vunpack.c.l.b16 %v84
    %v293 = vunpack.c.l.b16 %v85
    %v294 = vunpack.c.l.b16 %v86
    %v295 = vunpack.c.l.b16 %v87
    %v296 = vunpack.c.l.b16 %v88
    %v297 = vunpack.c.l.b16 %v89
    %v298 = vunpack.c.l.b16 %v90
    %v299 = vunpack.c.l.b16 %v91
    %v300 = vunpack.c.l.b16 %v92
    %v301 = vunpack.c.l.b16 %v93
    %v302 = vunpack.c.l.b16 %v94
    %v303 = vunpack.c.l.b16 %v95
    %v304 = vunpack.c.l.b16 %v96
    %v305 = vunpack.c.l.b16 %v97
    %v306 = vunpack.c.l.b16 %v98
    %v307 = vunpack.c.l.b16 %v99
    %v308 = vunpack.c.l.b16 %v100
    %v309 = vunpack.c.l.b16 %v101
    %v310 = vunpack.c.l.b16 %v102
    %v311 = vunpack.c.l.b16 %v103
    %v312 = vunpack.c.l.b16 %v104
    %v313 = vunpack.c.l.b16 %v105
    %v314 = vunpack.c.l.b16 %v106
    %v315 = vunpack.c.l.b16 %v107
    %v316 = vunpack.c.l.b16 %v108
    %v317 = vunpack.c.l.b16 %v109
    %v318 = vunpack.c.l.b16 %v110
    %v319 = vunpack.c.l.b16 %v111
    %v320 = vunpack.c.l.b16 %v112
    %v321 = vunpack.c.l.b16 %v113
    %v322 = vunpack.c.l.b16 %v114
    %v323 = vunpack.c.l.b16 %v115
    %v324 = vunpack.c.l.b16 %v116
    %v325 = vunpack.c.l.b16 %v117
    %v326 = vunpack.c.l.b16 %v118
    %v327 = vunpack.c.l.b16 %v119
    %v328 = vunpack.c.l.b16 %v120
    %v329 = vunpack.c.l.b16 %v121
    %v330 = vunpack.c.l.b16 %v122
    %v331 = vunpack.c.l.b16 %v123
    %v332 = vunpack.c.l.b16 %v124
    %v333 = vunpack.c.l.b16 %v125
    %v334 = vunpack.c.l.b16 %v126
    %v335 = vunpack.c.l.b16 %v127
    %v336 = vunpack.c.l.b16 %v128
    %v337 = vunpack.c.l.b16 %v129
    %v338 = vunpack.c.l.b16 %v130
    %v339 = vunpack.c.l.b16 %v131
    %v340 = vunpack.c.l.b16 %v132
    %v341 = vunpack.c.l.b16 %v133
    %v342 = vunpack.c.l.b16 %v134
    %v343 = vunpack.c.l.b16 %v135
    %v344 = vunpack.c.l.b16 %v136
    %v345 = vunpack.c.l.b16 %v137
    %v346 = vunpack.c.l.b16 %v138
    %v347 = vunpack.c.l.b16 %v139
    %v348 = vunpack.c.l.b16 %v140
    %v349 = vunpack.c.l.b16 %v141
    %v350 = vunpack.c.l.b16 %v142
    %v351 = vunpack.c.l.b16 %v143
    %v352 = vunpack.c.l.b16 %v144
    %v353 = vunpack.c.l.b16 %v145
    %v354 = vunpack.c.l.b16 %v146
    %v355 = vunpack.c.l.b16 %v147
    %v356 = vunpack.c.l.b16 %v148
    %v357 = vunpack.c.l.b16 %v149
    %v358 = vunpack.c.l.b16 %v150
    %v359 = vunpack.c.l.b16 %v151
    %v360 = vunpack.c.l.b16 %v152
    %v361 = vunpack.c.l.b16 %v153
    %v362 = vunpack.c.l.b16 %v154
    %v363 = vunpack.c.l.b16 %v155
    %v364 = vunpack.c.l.b16 %v156
    %v365 = vunpack.c.l.b16 %v157
    %v366 = vunpack.c.l.b16 %v158
    %v367 = vunpack.c.l.b16 %v159
    %v368 = vunpack.c.l.b16 %v160
    %v369 = vunpack.c.l.b16 %v161
    %v370 = vunpack.c.l.b16 %v162
    %v371 = vunpack.c.l.b16 %v163
    %v372 = vunpack.c.l.b16 %v164
    %v373 = vunpack.c.l.b16 %v165
    %v374 = vunpack.c.l.b16 %v166
    %v375 = vunpack.c.l.b16 %v167
    %v376 = vunpack.c.l.b16 %v168
    %v377 = vunpack.c.l.b16 %v169
    %v378 = vunpack.c.l.b16 %v170
    %v379 = vunpack.c.l.b16 %v171
    %v380 = vunpack.c.l.b16 %v172
    %v381 = vunpack.c.l.b16 %v173
    %v382 = vunpack.c.l.b16 %v174
    %v383 = vunpack.c.l.b16 %v175
    %v384 = vunpack.c.l.b16 %v176
    %v385 = vunpack.c.l.b16 %v177
    %v386 = vunpack.c.l.b16 %v178
    %v387 = vunpack.c.l.b16 %v179
    %v388 = vpack.c.b16 %v291, %v290
    %v389 = vpack.c.b16 %v293, %v292
    %v390 = vpack.c.b16 %v295, %v294
    %v391 = vpack.c.b16 %v297, %v296
    %v392 = vpack.c.b16 %v299, %v298
    %v393 = vpack.c.b16 %v301, %v300
    %v394 = vpack.c.b16 %v303, %v302
    %v395 = vpack.c.b16 %v305, %v304
    %v396 = vpack.c.b16 %v307, %v306
    %v397 = vpack.c.b16 %v309, %v308
    %v398 = vpack.c.b16 %v311, %v310
    %v399 = vpack.c.b16 %v313, %v312
    %v400 = vpack.c.b16 %v315, %v314
    %v401 = vpack.c.b16 %v317, %v316
    %v402 = vpack.c.b16 %v319, %v318
    %v403 = vpack.c.b16 %v321, %v320
    %v404 = vpack.c.b16 %v323, %v322
    %v405 = vpack.c.b16 %v325, %v324
    %v406 = vpack.c.b16 %v327, %v326
    %v407 = vpack.c.b16 %v329, %v328
    %v408 = vpack.c.b16 %v331, %v330
    %v409 = vpack.c.b16 %v333, %v332
    %v410 = vpack.c.b16 %v335, %v334
    %v411 = vpack.c.b16 %v337, %v336
    %v412 = vpack.c.b16 %v339, %v338
    %v413 = vpack.c.b16 %v341, %v340
    %v414 = vpack.c.b16 %v343, %v342
    %v415 = vpack.c.b16 %v345, %v344
    %v416 = vpack.c.b16 %v347, %v346
    %v417 = vpack.c.b16 %v349, %v348
    %v418 = vpack.c.b16 %v351, %v350
    %v419 = vpack.c.b16 %v353, %v352
    %v420 = vpack.c.b16 %v355, %v354
    %v421 = vpack.c.b16 %v357, %v356
    %v422 = vpack.c.b16 %v359, %v358
    %v423 = vpack.c.b16 %v361, %v360
    %v424 = vpack.c.b16 %v363, %v362
    %v425 = vpack.c.b16 %v365, %v364
    %v426 = vpack.c.b16 %v367, %v366
    %v427 = vpack.c.b16 %v369, %v368
    %v428 = vpack.c.b16 %v371, %v370
    %v429 = vpack.c.b16 %v373, %v372
    %v430 = vpack.c.b16 %v375, %v374
    %v431 = vpack.c.b16 %v377, %v376
    %v432 = vpack.c.b16 %v379, %v378
    %v433 = vpack.c.b16 %v381, %v380
    %v434 = vpack.c.b16 %v383, %v382
    %v435 = vpack.c.b16 %v385, %v384
    %v436 = vpack.c.b16 %v387, %v386
    %vm486 = vcmask 130048
    %v488 = vsel %vm486, %v186, 0
    %490 = vmatprep.subr.bf16.mxu0 0
    %491 = vmatpush1.bf16.msra.mxu0 %v388
    %492 = vmatprep.subr.bf16.mxu0 0
    %493 = vmatpush1.bf16.msra.mxu0 %v389
    %494 = vmatprep.subr.bf16.mxu0 0
    %495 = vmatpush1.bf16.msra.mxu0 %v390
    %496 = vmatprep.subr.bf16.mxu0 0
    %497 = vmatpush1.bf16.msra.mxu0 %v391
    %498 = vmatprep.subr.bf16.mxu0 0
    %499 = vmatpush1.bf16.msra.mxu0 %v392
    %500 = vmatprep.subr.bf16.mxu0 0
    %501 = vmatpush1.bf16.msra.mxu0 %v393
    %502 = vmatprep.subr.bf16.mxu0 0
    %503 = vmatpush1.bf16.msra.mxu0 %v394
    %504 = vmatprep.subr.bf16.mxu0 0
    %505 = vmatpush1.bf16.msra.mxu0 %v395
    %506 = vmatprep.subr.bf16.mxu0 0
    %507 = vmatpush1.bf16.msra.mxu0 %v396
    %508 = vmatprep.subr.bf16.mxu0 0
    %509 = vmatpush1.bf16.msra.mxu0 %v397
    %510 = vmatprep.subr.bf16.mxu0 0
    %511 = vmatpush1.bf16.msra.mxu0 %v398
    %512 = vmatprep.subr.bf16.mxu0 0
    %513 = vmatpush1.bf16.msra.mxu0 %v399
    %514 = vmatprep.subr.bf16.mxu0 0
    %515 = vmatpush1.bf16.msra.mxu0 %v400
    %516 = vmatprep.subr.bf16.mxu0 0
    %517 = vmatpush1.bf16.msra.mxu0 %v401
    %518 = vmatprep.subr.bf16.mxu0 0
    %519 = vmatpush1.bf16.msra.mxu0 %v402
    %520 = vmatprep.subr.bf16.mxu0 0
    %521 = vmatpush1.bf16.msra.mxu0 %v403
    %522 = vmatprep.mubr.bf16.mxu0 %v181
    %523 = vmatmul.mubr.bf16.gmra.mrb[0].mxu0 %v180
    %v524 = vpop.f32.mrb[0].mxu0
    %v525 = vadd.f32 %v191, %v524
    %v526 = vpop.f32.mrb[0].mxu0
    %v527 = vpop.f32.mrb[0].mxu0
    %v528 = vadd.f32 %v191, %v527
    %v529 = vpop.f32.mrb[0].mxu0
    %530 = vdwg.mxu0
    %531 = vmatprep.subr.bf16.mxu0 0
    %532 = vmatpush1.bf16.msra.mxu0 %v404
    %533 = vmatprep.subr.bf16.mxu0 0
    %534 = vmatpush1.bf16.msra.mxu0 %v405
    %535 = vmatprep.subr.bf16.mxu0 0
    %536 = vmatpush1.bf16.msra.mxu0 %v406
    %537 = vmatprep.subr.bf16.mxu0 0
    %538 = vmatpush1.bf16.msra.mxu0 %v407
    %539 = vmatprep.subr.bf16.mxu0 0
    %540 = vmatpush1.bf16.msra.mxu0 %v408
    %541 = vmatprep.subr.bf16.mxu0 0
    %542 = vmatpush1.bf16.msra.mxu0 %v409
    %543 = vmatprep.subr.bf16.mxu0 0
    %544 = vmatpush1.bf16.msra.mxu0 %v410
    %545 = vmatprep.subr.bf16.mxu0 0
    %546 = vmatpush1.bf16.msra.mxu0 %v411
    %547 = vmatprep.subr.bf16.mxu0 0
    %548 = vmatpush1.bf16.msra.mxu0 %v412
    %549 = vmatprep.subr.bf16.mxu0 0
    %550 = vmatpush1.bf16.msra.mxu0 %v413
    %551 = vmatprep.subr.bf16.mxu0 0
    %552 = vmatpush1.bf16.msra.mxu0 %v414
    %553 = vmatprep.subr.bf16.mxu0 0
    %554 = vmatpush1.bf16.msra.mxu0 %v415
    %555 = vmatprep.subr.bf16.mxu0 0
    %556 = vmatpush1.bf16.msra.mxu0 %v416
    %557 = vmatprep.subr.bf16.mxu0 0
    %558 = vmatpush1.bf16.msra.mxu0 %v417
    %559 = vmatprep.subr.bf16.mxu0 0
    %560 = vmatpush1.bf16.msra.mxu0 %v418
    %561 = vmatprep.subr.bf16.mxu0 0
    %562 = vmatpush1.bf16.msra.mxu0 %v419
    %563 = vmatprep.mubr.bf16.mxu0 %v183
    %564 = vmatmul.mubr.bf16.gmra.mrb[0].mxu0 %v182
    %v565 = vpop.f32.mrb[0].mxu0
    %v566 = vadd.f32 %v525, %v565
    %v567 = vpop.f32.mrb[0].mxu0
    %v568 = vpop.f32.mrb[0].mxu0
    %v569 = vadd.f32 %v528, %v568
    %v570 = vpop.f32.mrb[0].mxu0
    %571 = vdwg.mxu0
    %572 = vmatprep.subr.bf16.mxu0 0
    %573 = vmatpush1.bf16.msra.mxu0 %v420
    %574 = vmatprep.subr.bf16.mxu0 0
    %575 = vmatpush1.bf16.msra.mxu0 %v421
    %576 = vmatprep.subr.bf16.mxu0 0
    %577 = vmatpush1.bf16.msra.mxu0 %v422
    %578 = vmatprep.subr.bf16.mxu0 0
    %579 = vmatpush1.bf16.msra.mxu0 %v423
    %580 = vmatprep.subr.bf16.mxu0 0
    %581 = vmatpush1.bf16.msra.mxu0 %v424
    %582 = vmatprep.subr.bf16.mxu0 0
    %583 = vmatpush1.bf16.msra.mxu0 %v425
    %584 = vmatprep.subr.bf16.mxu0 0
    %585 = vmatpush1.bf16.msra.mxu0 %v426
    %586 = vmatprep.subr.bf16.mxu0 0
    %587 = vmatpush1.bf16.msra.mxu0 %v427
    %588 = vmatprep.subr.bf16.mxu0 0
    %589 = vmatpush1.bf16.msra.mxu0 %v428
    %590 = vmatprep.subr.bf16.mxu0 0
    %591 = vmatpush1.bf16.msra.mxu0 %v429
    %592 = vmatprep.subr.bf16.mxu0 0
    %593 = vmatpush1.bf16.msra.mxu0 %v430
    %594 = vmatprep.subr.bf16.mxu0 0
    %595 = vmatpush1.bf16.msra.mxu0 %v431
    %596 = vmatprep.subr.bf16.mxu0 0
    %597 = vmatpush1.bf16.msra.mxu0 %v432
    %598 = vmatprep.subr.bf16.mxu0 0
    %599 = vmatpush1.bf16.msra.mxu0 %v433
    %600 = vmatprep.subr.bf16.mxu0 0
    %601 = vmatpush1.bf16.msra.mxu0 %v434
    %602 = vmatprep.subr.bf16.mxu0 0
    %603 = vmatpush1.bf16.msra.mxu0 %v435
    %604 = vmatprep.mubr.bf16.mxu0 %v185
    %605 = vmatmul.mubr.bf16.gmra.mrb[0].mxu0 %v184
    %v606 = vpop.f32.mrb[0].mxu0
    %v607 = vadd.f32 %v566, %v606
    %v608 = vpop.f32.mrb[0].mxu0
    %v609 = vpop.f32.mrb[0].mxu0
    %v610 = vadd.f32 %v569, %v609
    %v611 = vpop.f32.mrb[0].mxu0
    %612 = vdwg.mxu0
    %613 = vmatprep.subr.bf16.mxu0 0
    %614 = vmatpush1.bf16.msra.mxu0 %v436
    %615 = vmatprep.subr.bf16.mxu0 0
    %616 = vmatpush1.bf16.msra.mxu0 0
    %617 = vmatprep.subr.bf16.mxu0 0
    %618 = vmatpush1.bf16.msra.mxu0 0
    %619 = vmatprep.subr.bf16.mxu0 0
    %620 = vmatpush1.bf16.msra.mxu0 0
    %621 = vmatprep.subr.bf16.mxu0 0
    %622 = vmatpush1.bf16.msra.mxu0 0
    %623 = vmatprep.subr.bf16.mxu0 0
    %624 = vmatpush1.bf16.msra.mxu0 0
    %625 = vmatprep.subr.bf16.mxu0 0
    %626 = vmatpush1.bf16.msra.mxu0 0
    %627 = vmatprep.subr.bf16.mxu0 0
    %628 = vmatpush1.bf16.msra.mxu0 0
    %629 = vmatprep.subr.bf16.mxu0 0
    %630 = vmatpush1.bf16.msra.mxu0 0
    %631 = vmatprep.subr.bf16.mxu0 0
    %632 = vmatpush1.bf16.msra.mxu0 0
    %633 = vmatprep.subr.bf16.mxu0 0
    %634 = vmatpush1.bf16.msra.mxu0 0
    %635 = vmatprep.subr.bf16.mxu0 0
    %636 = vmatpush1.bf16.msra.mxu0 0
    %637 = vmatprep.subr.bf16.mxu0 0
    %638 = vmatpush1.bf16.msra.mxu0 0
    %639 = vmatprep.subr.bf16.mxu0 0
    %640 = vmatpush1.bf16.msra.mxu0 0
    %641 = vmatprep.subr.bf16.mxu0 0
    %642 = vmatpush1.bf16.msra.mxu0 0
    %643 = vmatprep.subr.bf16.mxu0 0
    %644 = vmatpush1.bf16.msra.mxu0 0
    %645 = vmatprep.mubr.bf16.mxu0 0
    %646 = vmatmul.mubr.bf16.gmra.mrb[0].mxu0 %v488
    %v647 = vpop.f32.mrb[0].mxu0
    %v648 = vadd.f32 %v607, %v647
    %v649 = vpop.f32.mrb[0].mxu0
    %v650 = vpop.f32.mrb[0].mxu0
    %v651 = vadd.f32 %v610, %v650
    %v652 = vpop.f32.mrb[0].mxu0
    %653 = vdwg.mxu0
    %v654 = vmax.f32 %v648, 0.0
    %v655 = vmax.f32 %v651, 0.0
    %v656 = vld [vmem:[%s2] sm:$0xf]
    %v657 = vld [vmem:[%s2 + $0x4] sm:$0xf]
    %v658 = vld [vmem:[%s2 + $0x8] sm:$0xf]
    %v659 = vld [vmem:[%s2 + $0xc] sm:$0xf]
    %v660 = vld [vmem:[%s2 + $0x10] sm:$0xf]
    %v661 = vld [vmem:[%s2 + $0x14] sm:$0xf]
    %v662 = vld [vmem:[%s2 + $0x18] sm:$0xf]
    %v663 = vld [vmem:[%s2 + $0x1c] sm:$0xf]
    %v664 = vld [vmem:[%s2 + $0x20] sm:$0xf]
    %v665 = vld [vmem:[%s2 + $0x24] sm:$0xf]
    %v666 = vld [vmem:[%s2 + $0x28] sm:$0xf]
    %v667 = vld [vmem:[%s2 + $0x2c] sm:$0xf]
    %v668 = vld [vmem:[%s2 + $0x30] sm:$0xf]
    %v669 = vld [vmem:[%s2 + $0x34] sm:$0xf]
    %v670 = vld [vmem:[%s2 + $0x38] sm:$0xf]
    %v671 = vld [vmem:[%s2 + $0x3c] sm:$0xf]
    %v672 = vpack.c.bf16 %v655, %v654
    %v673 = vld [vmem:[%s6 + $0x2] sm:$0x1]
    %v674 = vlaneseq
    %v675 = vshrl.u32 %v674, 7
    %v676 = vsub.s32 0, %v675
    %v677 = vrot.slane %v673, %v676
    %v694 = vunpack.c.l.b16 %v656
    %v695 = vunpack.c.l.b16 %v657
    %v696 = vunpack.c.l.b16 %v658
    %v697 = vunpack.c.l.b16 %v659
    %v698 = vunpack.c.l.b16 %v660
    %v699 = vunpack.c.l.b16 %v661
    %v700 = vunpack.c.l.b16 %v662
    %v701 = vunpack.c.l.b16 %v663
    %v702 = vunpack.c.l.b16 %v664
    %v703 = vunpack.c.l.b16 %v665
    %v704 = vunpack.c.l.b16 %v666
    %v705 = vunpack.c.l.b16 %v667
    %v706 = vunpack.c.l.b16 %v668
    %v707 = vunpack.c.l.b16 %v669
    %v708 = vunpack.c.l.b16 %v670
    %v709 = vunpack.c.l.b16 %v671
    %v710 = vpack.c.b16 %v695, %v694
    %v711 = vpack.c.b16 %v697, %v696
    %v712 = vpack.c.b16 %v699, %v698
    %v713 = vpack.c.b16 %v701, %v700
    %v714 = vpack.c.b16 %v703, %v702
    %v715 = vpack.c.b16 %v705, %v704
    %v716 = vpack.c.b16 %v707, %v706
    %v717 = vpack.c.b16 %v709, %v708
    %726 = vmatprep.subr.bf16.mxu0 0
    %727 = vmatpush1.bf16.msra.mxu0 %v710
    %728 = vmatprep.subr.bf16.mxu0 0
    %729 = vmatpush1.bf16.msra.mxu0 %v711
    %730 = vmatprep.subr.bf16.mxu0 0
    %731 = vmatpush1.bf16.msra.mxu0 %v712
    %732 = vmatprep.subr.bf16.mxu0 0
    %733 = vmatpush1.bf16.msra.mxu0 %v713
    %734 = vmatprep.subr.bf16.mxu0 0
    %735 = vmatpush1.bf16.msra.mxu0 %v714
    %736 = vmatprep.subr.bf16.mxu0 0
    %737 = vmatpush1.bf16.msra.mxu0 %v715
    %738 = vmatprep.subr.bf16.mxu0 0
    %739 = vmatpush1.bf16.msra.mxu0 %v716
    %740 = vmatprep.subr.bf16.mxu0 0
    %741 = vmatpush1.bf16.msra.mxu0 %v717
    %742 = vmatprep.subr.bf16.mxu0 0
    %743 = vmatpush1.bf16.msra.mxu0 0
    %744 = vmatprep.subr.bf16.mxu0 0
    %745 = vmatpush1.bf16.msra.mxu0 0
    %746 = vmatprep.subr.bf16.mxu0 0
    %747 = vmatpush1.bf16.msra.mxu0 0
    %748 = vmatprep.subr.bf16.mxu0 0
    %749 = vmatpush1.bf16.msra.mxu0 0
    %750 = vmatprep.subr.bf16.mxu0 0
    %751 = vmatpush1.bf16.msra.mxu0 0
    %752 = vmatprep.subr.bf16.mxu0 0
    %753 = vmatpush1.bf16.msra.mxu0 0
    %754 = vmatprep.subr.bf16.mxu0 0
    %755 = vmatpush1.bf16.msra.mxu0 0
    %756 = vmatprep.subr.bf16.mxu0 0
    %757 = vmatpush1.bf16.msra.mxu0 0
    %758 = vmatprep.mubr.bf16.mxu0 0
    %759 = vmatmul.mubr.bf16.gmra.mrb[0].mxu0 %v672
    %v760 = vpop.f32.mrb[0].mxu0
    %v761 = vadd.f32 %v677, %v760
    %v762 = vpop.f32.mrb[0].mxu0
    %v763 = vpop.f32.mrb[0].mxu0
    %v764 = vadd.f32 %v677, %v763
    %v765 = vpop.f32.mrb[0].mxu0
    %766 = vdwg.mxu0
    %v767 = vmax.f32 %v761, 0.0
    %v768 = vmax.f32 %v764, 0.0
    %v769 = vld [vmem:[%s3] sm:$0xff]
    %v770 = vld [vmem:[%s3 + $0x8] sm:$0xff]
    %v771 = vld [vmem:[%s3 + $0x10] sm:$0xff]
    %v772 = vld [vmem:[%s3 + $0x18] sm:$0xff]
    %v773 = vld [vmem:[%s3 + $0x20] sm:$0xff]
    %v774 = vld [vmem:[%s3 + $0x28] sm:$0xff]
    %v775 = vld [vmem:[%s3 + $0x30] sm:$0xff]
    %v776 = vld [vmem:[%s3 + $0x38] sm:$0xff]
    %v777 = vld [vmem:[%s3 + $0x40] sm:$0xff]
    %v778 = vld [vmem:[%s3 + $0x48] sm:$0xff]
    %v779 = vld [vmem:[%s3 + $0x50] sm:$0xff]
    %v780 = vld [vmem:[%s3 + $0x58] sm:$0xff]
    %v781 = vld [vmem:[%s3 + $0x60] sm:$0xff]
    %v782 = vld [vmem:[%s3 + $0x68] sm:$0xff]
    %v783 = vld [vmem:[%s3 + $0x70] sm:$0xff]
    %v784 = vld [vmem:[%s3 + $0x78] sm:$0xff]
    %v785 = vpack.c.bf16 %v768, %v767
    %s786 = scalar_lea.vmem %s6, 4
    %v787 = vld [vmem:[%s786] ss:$2 sm:$0x3]
    %v789 = vlaneseq
    %v790 = vshrl.u32 %v789, 7
    %v791 = vsub.s32 0, %v790
    %v792 = vrot.slane %v787, %v791
    %v793 = vlaneseq
    %v794 = vshrl.u32 %v793, 7
    %v795 = vsub.s32 1, %v794
    %v796 = vrot.slane %v787, %v795
    %v815 = vunpack.c.l.b16 %v769
    %v816 = vunpack.c.h.b16 %v769
    %v817 = vunpack.c.l.b16 %v770
    %v818 = vunpack.c.h.b16 %v770
    %v819 = vunpack.c.l.b16 %v771
    %v820 = vunpack.c.h.b16 %v771
    %v821 = vunpack.c.l.b16 %v772
    %v822 = vunpack.c.h.b16 %v772
    %v823 = vunpack.c.l.b16 %v773
    %v824 = vunpack.c.h.b16 %v773
    %v825 = vunpack.c.l.b16 %v774
    %v826 = vunpack.c.h.b16 %v774
    %v827 = vunpack.c.l.b16 %v775
    %v828 = vunpack.c.h.b16 %v775
    %v829 = vunpack.c.l.b16 %v776
    %v830 = vunpack.c.h.b16 %v776
    %v831 = vunpack.c.l.b16 %v777
    %v832 = vunpack.c.h.b16 %v777
    %v833 = vunpack.c.l.b16 %v778
    %v834 = vunpack.c.h.b16 %v778
    %v835 = vunpack.c.l.b16 %v779
    %v836 = vunpack.c.h.b16 %v779
    %v837 = vunpack.c.l.b16 %v780
    %v838 = vunpack.c.h.b16 %v780
    %v839 = vunpack.c.l.b16 %v781
    %v840 = vunpack.c.h.b16 %v781
    %v841 = vunpack.c.l.b16 %v782
    %v842 = vunpack.c.h.b16 %v782
    %v843 = vunpack.c.l.b16 %v783
    %v844 = vunpack.c.h.b16 %v783
    %v845 = vunpack.c.l.b16 %v784
    %v846 = vunpack.c.h.b16 %v784
    %v847 = vpack.c.b16 %v817, %v815
    %v848 = vpack.c.b16 %v818, %v816
    %v849 = vpack.c.b16 %v821, %v819
    %v850 = vpack.c.b16 %v822, %v820
    %v851 = vpack.c.b16 %v825, %v823
    %v852 = vpack.c.b16 %v826, %v824
    %v853 = vpack.c.b16 %v829, %v827
    %v854 = vpack.c.b16 %v830, %v828
    %v855 = vpack.c.b16 %v833, %v831
    %v856 = vpack.c.b16 %v834, %v832
    %v857 = vpack.c.b16 %v837, %v835
    %v858 = vpack.c.b16 %v838, %v836
    %v859 = vpack.c.b16 %v841, %v839
    %v860 = vpack.c.b16 %v842, %v840
    %v861 = vpack.c.b16 %v845, %v843
    %v862 = vpack.c.b16 %v846, %v844
    %879 = vmatprep.subr.bf16.mxu0 %v848
    %880 = vmatpush1.bf16.msra.mxu0 %v847
    %881 = vmatprep.subr.bf16.mxu0 %v850
    %882 = vmatpush1.bf16.msra.mxu0 %v849
    %883 = vmatprep.subr.bf16.mxu0 %v852
    %884 = vmatpush1.bf16.msra.mxu0 %v851
    %885 = vmatprep.subr.bf16.mxu0 %v854
    %886 = vmatpush1.bf16.msra.mxu0 %v853
    %887 = vmatprep.subr.bf16.mxu0 %v856
    %888 = vmatpush1.bf16.msra.mxu0 %v855
    %889 = vmatprep.subr.bf16.mxu0 %v858
    %890 = vmatpush1.bf16.msra.mxu0 %v857
    %891 = vmatprep.subr.bf16.mxu0 %v860
    %892 = vmatpush1.bf16.msra.mxu0 %v859
    %893 = vmatprep.subr.bf16.mxu0 %v862
    %894 = vmatpush1.bf16.msra.mxu0 %v861
    %895 = vmatprep.subr.bf16.mxu0 0
    %896 = vmatpush1.bf16.msra.mxu0 0
    %897 = vmatprep.subr.bf16.mxu0 0
    %898 = vmatpush1.bf16.msra.mxu0 0
    %899 = vmatprep.subr.bf16.mxu0 0
    %900 = vmatpush1.bf16.msra.mxu0 0
    %901 = vmatprep.subr.bf16.mxu0 0
    %902 = vmatpush1.bf16.msra.mxu0 0
    %903 = vmatprep.subr.bf16.mxu0 0
    %904 = vmatpush1.bf16.msra.mxu0 0
    %905 = vmatprep.subr.bf16.mxu0 0
    %906 = vmatpush1.bf16.msra.mxu0 0
    %907 = vmatprep.subr.bf16.mxu0 0
    %908 = vmatpush1.bf16.msra.mxu0 0
    %909 = vmatprep.subr.bf16.mxu0 0
    %910 = vmatpush1.bf16.msra.mxu0 0
    %911 = vmatprep.mubr.bf16.mxu0 0
    %912 = vmatmul.mubr.bf16.gmra.mrb[0].mxu0 %v785
    %v913 = vpop.f32.mrb[0].mxu0
    %v914 = vadd.f32 %v792, %v913
    %v915 = vpop.f32.mrb[0].mxu0
    %v916 = vadd.f32 %v796, %v915
    %v917 = vpop.f32.mrb[0].mxu0
    %v918 = vadd.f32 %v792, %v917
    %v919 = vpop.f32.mrb[0].mxu0
    %v920 = vadd.f32 %v796, %v919
    %921 = vdwg.mxu0
    %v922 = vmax.f32 %v914, 0.0
    %v923 = vmax.f32 %v916, 0.0
    %v924 = vmax.f32 %v918, 0.0
    %v925 = vmax.f32 %v920, 0.0
    %v926 = vld [vmem:[#allocation4] sm:$0xff]
    %v927 = vld [vmem:[#allocation4 + $0x8] sm:$0xff]
    %v928 = vld [vmem:[#allocation4 + $0x10] sm:$0xff]
    %v929 = vld [vmem:[#allocation4 + $0x18] sm:$0xff]
    %v930 = vld [vmem:[#allocation4 + $0x20] sm:$0xff]
    %v931 = vld [vmem:[#allocation4 + $0x28] sm:$0xff]
    %v932 = vld [vmem:[#allocation4 + $0x30] sm:$0xff]
    %v933 = vld [vmem:[#allocation4 + $0x38] sm:$0xff]
    %v934 = vld [vmem:[#allocation4 + $0x40] sm:$0xff]
    %v935 = vld [vmem:[#allocation4 + $0x48] sm:$0xff]
    %v936 = vld [vmem:[#allocation4 + $0x50] sm:$0xff]
    %v937 = vld [vmem:[#allocation4 + $0x58] sm:$0xff]
    %v938 = vld [vmem:[#allocation4 + $0x60] sm:$0xff]
    %v939 = vld [vmem:[#allocation4 + $0x68] sm:$0xff]
    %v940 = vld [vmem:[#allocation4 + $0x70] sm:$0xff]
    %v941 = vld [vmem:[#allocation4 + $0x78] sm:$0xff]
    %v942 = vld [vmem:[#allocation4 + $0x80] sm:$0xff]
    %v943 = vld [vmem:[#allocation4 + $0x88] sm:$0xff]
    %v944 = vld [vmem:[#allocation4 + $0x90] sm:$0xff]
    %v945 = vld [vmem:[#allocation4 + $0x98] sm:$0xff]
    %v946 = vld [vmem:[#allocation4 + $0xa0] sm:$0xff]
    %v947 = vld [vmem:[#allocation4 + $0xa8] sm:$0xff]
    %v948 = vld [vmem:[#allocation4 + $0xb0] sm:$0xff]
    %v949 = vld [vmem:[#allocation4 + $0xb8] sm:$0xff]
    %v950 = vld [vmem:[#allocation4 + $0xc0] sm:$0xff]
    %v951 = vld [vmem:[#allocation4 + $0xc8] sm:$0xff]
    %v952 = vld [vmem:[#allocation4 + $0xd0] sm:$0xff]
    %v953 = vld [vmem:[#allocation4 + $0xd8] sm:$0xff]
    %v954 = vld [vmem:[#allocation4 + $0xe0] sm:$0xff]
    %v955 = vld [vmem:[#allocation4 + $0xe8] sm:$0xff]
    %v956 = vld [vmem:[#allocation4 + $0xf0] sm:$0xff]
    %v957 = vld [vmem:[#allocation4 + $0xf8] sm:$0xff]
    %v958 = vunpack.c.l.s8.bf16 %v926
    %v959 = vunpack.c.l.s8.bf16 %v927
    %v960 = vunpack.c.l.s8.bf16 %v928
    %v961 = vunpack.c.l.s8.bf16 %v929
    %v962 = vunpack.c.h.s8.bf16 %v926
    %v963 = vunpack.c.h.s8.bf16 %v927
    %v964 = vunpack.c.h.s8.bf16 %v928
    %v965 = vunpack.c.h.s8.bf16 %v929
    %v966 = vunpack.c.l.s8.bf16 %v930
    %v967 = vunpack.c.l.s8.bf16 %v931
    %v968 = vunpack.c.l.s8.bf16 %v932
    %v969 = vunpack.c.l.s8.bf16 %v933
    %v970 = vunpack.c.h.s8.bf16 %v930
    %v971 = vunpack.c.h.s8.bf16 %v931
    %v972 = vunpack.c.h.s8.bf16 %v932
    %v973 = vunpack.c.h.s8.bf16 %v933
    %v974 = vunpack.c.l.s8.bf16 %v934
    %v975 = vunpack.c.l.s8.bf16 %v935
    %v976 = vunpack.c.l.s8.bf16 %v936
    %v977 = vunpack.c.l.s8.bf16 %v937
    %v978 = vunpack.c.h.s8.bf16 %v934
    %v979 = vunpack.c.h.s8.bf16 %v935
    %v980 = vunpack.c.h.s8.bf16 %v936
    %v981 = vunpack.c.h.s8.bf16 %v937
    %v982 = vunpack.c.l.s8.bf16 %v938
    %v983 = vunpack.c.l.s8.bf16 %v939
    %v984 = vunpack.c.l.s8.bf16 %v940
    %v985 = vunpack.c.l.s8.bf16 %v941
    %v986 = vunpack.c.h.s8.bf16 %v938
    %v987 = vunpack.c.h.s8.bf16 %v939
    %v988 = vunpack.c.h.s8.bf16 %v940
    %v989 = vunpack.c.h.s8.bf16 %v941
    %v990 = vunpack.c.l.s8.bf16 %v942
    %v991 = vunpack.c.l.s8.bf16 %v943
    %v992 = vunpack.c.l.s8.bf16 %v944
    %v993 = vunpack.c.l.s8.bf16 %v945
    %v994 = vunpack.c.h.s8.bf16 %v942
    %v995 = vunpack.c.h.s8.bf16 %v943
    %v996 = vunpack.c.h.s8.bf16 %v944
    %v997 = vunpack.c.h.s8.bf16 %v945
    %v998 = vunpack.c.l.s8.bf16 %v946
    %v999 = vunpack.c.l.s8.bf16 %v947
    %v1000 = vunpack.c.l.s8.bf16 %v948
    %v1001 = vunpack.c.l.s8.bf16 %v949
    %v1002 = vunpack.c.h.s8.bf16 %v946
    %v1003 = vunpack.c.h.s8.bf16 %v947
    %v1004 = vunpack.c.h.s8.bf16 %v948
    %v1005 = vunpack.c.h.s8.bf16 %v949
    %v1006 = vunpack.c.l.s8.bf16 %v950
    %v1007 = vunpack.c.l.s8.bf16 %v951
    %v1008 = vunpack.c.l.s8.bf16 %v952
    %v1009 = vunpack.c.l.s8.bf16 %v953
    %v1010 = vunpack.c.h.s8.bf16 %v950
    %v1011 = vunpack.c.h.s8.bf16 %v951
    %v1012 = vunpack.c.h.s8.bf16 %v952
    %v1013 = vunpack.c.h.s8.bf16 %v953
    %v1014 = vunpack.c.l.s8.bf16 %v954
    %v1015 = vunpack.c.l.s8.bf16 %v955
    %v1016 = vunpack.c.l.s8.bf16 %v956
    %v1017 = vunpack.c.l.s8.bf16 %v957
    %v1018 = vunpack.c.h.s8.bf16 %v954
    %v1019 = vunpack.c.h.s8.bf16 %v955
    %v1020 = vunpack.c.h.s8.bf16 %v956
    %v1021 = vunpack.c.h.s8.bf16 %v957
    %v1022 = vpack.c.bf16 %v924, %v922
    %v1023 = vpack.c.bf16 %v925, %v923
    %1024 = vmatprep.subr.bf16.mxu0 %v959
    %1025 = vmatpush1.bf16.msra.mxu0 %v958
    %1026 = vmatprep.subr.bf16.mxu0 %v963
    %1027 = vmatpush1.bf16.msra.mxu0 %v962
    %1028 = vmatprep.subr.bf16.mxu0 %v967
    %1029 = vmatpush1.bf16.msra.mxu0 %v966
    %1030 = vmatprep.subr.bf16.mxu0 %v971
    %1031 = vmatpush1.bf16.msra.mxu0 %v970
    %1032 = vmatprep.subr.bf16.mxu0 %v975
    %1033 = vmatpush1.bf16.msra.mxu0 %v974
    %1034 = vmatprep.subr.bf16.mxu0 %v979
    %1035 = vmatpush1.bf16.msra.mxu0 %v978
    %1036 = vmatprep.subr.bf16.mxu0 %v983
    %1037 = vmatpush1.bf16.msra.mxu0 %v982
    %1038 = vmatprep.subr.bf16.mxu0 %v987
    %1039 = vmatpush1.bf16.msra.mxu0 %v986
    %1040 = vmatprep.subr.bf16.mxu0 %v991
    %1041 = vmatpush1.bf16.msra.mxu0 %v990
    %1042 = vmatprep.subr.bf16.mxu0 %v995
    %1043 = vmatpush1.bf16.msra.mxu0 %v994
    %1044 = vmatprep.subr.bf16.mxu0 %v999
    %1045 = vmatpush1.bf16.msra.mxu0 %v998
    %1046 = vmatprep.subr.bf16.mxu0 %v1003
    %1047 = vmatpush1.bf16.msra.mxu0 %v1002
    %1048 = vmatprep.subr.bf16.mxu0 %v1007
    %1049 = vmatpush1.bf16.msra.mxu0 %v1006
    %1050 = vmatprep.subr.bf16.mxu0 %v1011
    %1051 = vmatpush1.bf16.msra.mxu0 %v1010
    %1052 = vmatprep.subr.bf16.mxu0 %v1015
    %1053 = vmatpush1.bf16.msra.mxu0 %v1014
    %1054 = vmatprep.subr.bf16.mxu0 %v1019
    %1055 = vmatpush1.bf16.msra.mxu0 %v1018
    %1056 = vmatprep.mubr.bf16.mxu0 %v1023
    %1057 = vmatmul.mubr.bf16.gmra.mrb[0].mxu0 %v1022
    %v1058 = vpop.f32.mrb[0].mxu0
    %v1059 = vadd.f32 0.0, %v1058
    %v1060 = vpop.f32.mrb[0].mxu0
    %v1061 = vadd.f32 0.0, %v1060
    %v1062 = vpop.f32.mrb[0].mxu0
    %v1063 = vadd.f32 0.0, %v1062
    %v1064 = vpop.f32.mrb[0].mxu0
    %v1065 = vadd.f32 0.0, %v1064
    %1066 = vdwg.mxu0
    %1067 = vmatprep.subr.bf16.mxu0 %v961
    %1068 = vmatpush1.bf16.msra.mxu0 %v960
    %1069 = vmatprep.subr.bf16.mxu0 %v965
    %1070 = vmatpush1.bf16.msra.mxu0 %v964
    %1071 = vmatprep.subr.bf16.mxu0 %v969
    %1072 = vmatpush1.bf16.msra.mxu0 %v968
    %1073 = vmatprep.subr.bf16.mxu0 %v973
    %1074 = vmatpush1.bf16.msra.mxu0 %v972
    %1075 = vmatprep.subr.bf16.mxu0 %v977
    %1076 = vmatpush1.bf16.msra.mxu0 %v976
    %1077 = vmatprep.subr.bf16.mxu0 %v981
    %1078 = vmatpush1.bf16.msra.mxu0 %v980
    %1079 = vmatprep.subr.bf16.mxu0 %v985
    %1080 = vmatpush1.bf16.msra.mxu0 %v984
    %1081 = vmatprep.subr.bf16.mxu0 %v989
    %1082 = vmatpush1.bf16.msra.mxu0 %v988
    %1083 = vmatprep.subr.bf16.mxu0 %v993
    %1084 = vmatpush1.bf16.msra.mxu0 %v992
    %1085 = vmatprep.subr.bf16.mxu0 %v997
    %1086 = vmatpush1.bf16.msra.mxu0 %v996
    %1087 = vmatprep.subr.bf16.mxu0 %v1001
    %1088 = vmatpush1.bf16.msra.mxu0 %v1000
    %1089 = vmatprep.subr.bf16.mxu0 %v1005
    %1090 = vmatpush1.bf16.msra.mxu0 %v1004
    %1091 = vmatprep.subr.bf16.mxu0 %v1009
    %1092 = vmatpush1.bf16.msra.mxu0 %v1008
    %1093 = vmatprep.subr.bf16.mxu0 %v1013
    %1094 = vmatpush1.bf16.msra.mxu0 %v1012
    %1095 = vmatprep.subr.bf16.mxu0 %v1017
    %1096 = vmatpush1.bf16.msra.mxu0 %v1016
    %1097 = vmatprep.subr.bf16.mxu0 %v1021
    %1098 = vmatpush1.bf16.msra.mxu0 %v1020
    %1099 = vmatprep.mubr.bf16.mxu0 %v1023
    %1100 = vmatmul.mubr.bf16.gmra.mrb[0].mxu0 %v1022
    %v1101 = vpop.f32.mrb[0].mxu0
    %v1102 = vadd.f32 0.0, %v1101
    %v1103 = vpop.f32.mrb[0].mxu0
    %v1104 = vadd.f32 0.0, %v1103
    %v1105 = vpop.f32.mrb[0].mxu0
    %v1106 = vadd.f32 0.0, %v1105
    %v1107 = vpop.f32.mrb[0].mxu0
    %v1108 = vadd.f32 0.0, %v1107
    %1109 = vdwg.mxu0
    %s1110 = scalar_lea.vmem %s6, 9
    %v1111 = vld [vmem:[%s1110] ss:$2 sm:$0xf]
    %v1113 = vlaneseq
    %v1114 = vshrl.u32 %v1113, 7
    %v1115 = vsub.s32 0, %v1114
    %v1116 = vrot.slane %v1111, %v1115
    %v1117 = vlaneseq
    %v1118 = vshrl.u32 %v1117, 7
    %v1119 = vsub.s32 1, %v1118
    %v1120 = vrot.slane %v1111, %v1119
    %v1121 = vlaneseq
    %v1122 = vshrl.u32 %v1121, 7
    %v1123 = vsub.s32 2, %v1122
    %v1124 = vrot.slane %v1111, %v1123
    %v1125 = vlaneseq
    %v1126 = vshrl.u32 %v1125, 7
    %v1127 = vsub.s32 3, %v1126
    %v1128 = vrot.slane %v1111, %v1127
    %v1133 = vmul.f32 %v1059, %v1116
    %v1134 = vmul.f32 %v1061, %v1120
    %v1135 = vmul.f32 %v1102, %v1124
    %v1136 = vmul.f32 %v1104, %v1128
    %v1137 = vmul.f32 %v1063, %v1116
    %v1138 = vmul.f32 %v1065, %v1120
    %v1139 = vmul.f32 %v1106, %v1124
    %v1140 = vmul.f32 %v1108, %v1128
    %s1141 = scalar_lea.vmem %s6, 8
    %v1142 = vld [vmem:[%s1141] ss:$2 sm:$0xf]
    %v1144 = vlaneseq
    %v1145 = vshrl.u32 %v1144, 7
    %v1146 = vsub.s32 0, %v1145
    %v1147 = vrot.slane %v1142, %v1146
    %v1148 = vlaneseq
    %v1149 = vshrl.u32 %v1148, 7
    %v1150 = vsub.s32 1, %v1149
    %v1151 = vrot.slane %v1142, %v1150
    %v1152 = vlaneseq
    %v1153 = vshrl.u32 %v1152, 7
    %v1154 = vsub.s32 2, %v1153
    %v1155 = vrot.slane %v1142, %v1154
    %v1156 = vlaneseq
    %v1157 = vshrl.u32 %v1156, 7
    %v1158 = vsub.s32 3, %v1157
    %v1159 = vrot.slane %v1142, %v1158
    %v1164 = vadd.f32 %v1133, %v1147
    %v1165 = vadd.f32 %v1134, %v1151
    %v1166 = vadd.f32 %v1135, %v1155
    %v1167 = vadd.f32 %v1136, %v1159
    %v1168 = vadd.f32 %v1137, %v1147
    %v1169 = vadd.f32 %v1138, %v1151
    %v1170 = vadd.f32 %v1139, %v1155
    %v1171 = vadd.f32 %v1140, %v1159
    %v1172 = vmax.f32 %v1164, 0.0
    %v1173 = vmax.f32 %v1165, 0.0
    %v1174 = vmax.f32 %v1166, 0.0
    %v1175 = vmax.f32 %v1167, 0.0
    %v1176 = vmax.f32 %v1168, 0.0
    %v1177 = vmax.f32 %v1169, 0.0
    %v1178 = vmax.f32 %v1170, 0.0
    %v1179 = vmax.f32 %v1171, 0.0
    %v1180 = vld [vmem:[#allocation6] sm:$0xff]
    %v1181 = vld [vmem:[#allocation6 + $0x8] sm:$0xff]
    %v1182 = vld [vmem:[#allocation6 + $0x10] sm:$0xff]
    %v1183 = vld [vmem:[#allocation6 + $0x18] sm:$0xff]
    %v1184 = vld [vmem:[#allocation6 + $0x20] sm:$0xff]
    %v1185 = vld [vmem:[#allocation6 + $0x28] sm:$0xff]
    %v1186 = vld [vmem:[#allocation6 + $0x30] sm:$0xff]
    %v1187 = vld [vmem:[#allocation6 + $0x38] sm:$0xff]
    %v1188 = vld [vmem:[#allocation6 + $0x40] sm:$0xff]
    %v1189 = vld [vmem:[#allocation6 + $0x48] sm:$0xff]
    %v1190 = vld [vmem:[#allocation6 + $0x50] sm:$0xff]
    %v1191 = vld [vmem:[#allocation6 + $0x58] sm:$0xff]
    %v1192 = vld [vmem:[#allocation6 + $0x60] sm:$0xff]
    %v1193 = vld [vmem:[#allocation6 + $0x68] sm:$0xff]
    %v1194 = vld [vmem:[#allocation6 + $0x70] sm:$0xff]
    %v1195 = vld [vmem:[#allocation6 + $0x78] sm:$0xff]
    %v1196 = vld [vmem:[#allocation6 + $0x80] sm:$0xff]
    %v1197 = vld [vmem:[#allocation6 + $0x88] sm:$0xff]
    %v1198 = vld [vmem:[#allocation6 + $0x90] sm:$0xff]
    %v1199 = vld [vmem:[#allocation6 + $0x98] sm:$0xff]
    %v1200 = vld [vmem:[#allocation6 + $0xa0] sm:$0xff]
    %v1201 = vld [vmem:[#allocation6 + $0xa8] sm:$0xff]
    %v1202 = vld [vmem:[#allocation6 + $0xb0] sm:$0xff]
    %v1203 = vld [vmem:[#allocation6 + $0xb8] sm:$0xff]
    %v1204 = vld [vmem:[#allocation6 + $0xc0] sm:$0xff]
    %v1205 = vld [vmem:[#allocation6 + $0xc8] sm:$0xff]
    %v1206 = vld [vmem:[#allocation6 + $0xd0] sm:$0xff]
    %v1207 = vld [vmem:[#allocation6 + $0xd8] sm:$0xff]
    %v1208 = vld [vmem:[#allocation6 + $0xe0] sm:$0xff]
    %v1209 = vld [vmem:[#allocation6 + $0xe8] sm:$0xff]
    %v1210 = vld [vmem:[#allocation6 + $0xf0] sm:$0xff]
    %v1211 = vld [vmem:[#allocation6 + $0xf8] sm:$0xff]
    %v1212 = vld [vmem:[#allocation6 + $0x100] sm:$0xff]
    %v1213 = vld [vmem:[#allocation6 + $0x108] sm:$0xff]
    %v1214 = vld [vmem:[#allocation6 + $0x110] sm:$0xff]
    %v1215 = vld [vmem:[#allocation6 + $0x118] sm:$0xff]
    %v1216 = vld [vmem:[#allocation6 + $0x120] sm:$0xff]
    %v1217 = vld [vmem:[#allocation6 + $0x128] sm:$0xff]
    %v1218 = vld [vmem:[#allocation6 + $0x130] sm:$0xff]
    %v1219 = vld [vmem:[#allocation6 + $0x138] sm:$0xff]
    %v1220 = vld [vmem:[#allocation6 + $0x140] sm:$0xff]
    %v1221 = vld [vmem:[#allocation6 + $0x148] sm:$0xff]
    %v1222 = vld [vmem:[#allocation6 + $0x150] sm:$0xff]
    %v1223 = vld [vmem:[#allocation6 + $0x158] sm:$0xff]
    %v1224 = vld [vmem:[#allocation6 + $0x160] sm:$0xff]
    %v1225 = vld [vmem:[#allocation6 + $0x168] sm:$0xff]
    %v1226 = vld [vmem:[#allocation6 + $0x170] sm:$0xff]
    %v1227 = vld [vmem:[#allocation6 + $0x178] sm:$0xff]
    %v1228 = vld [vmem:[#allocation6 + $0x180] sm:$0xff]
    %v1229 = vld [vmem:[#allocation6 + $0x188] sm:$0xff]
    %v1230 = vld [vmem:[#allocation6 + $0x190] sm:$0xff]
    %v1231 = vld [vmem:[#allocation6 + $0x198] sm:$0xff]
    %v1232 = vld [vmem:[#allocation6 + $0x1a0] sm:$0xff]
    %v1233 = vld [vmem:[#allocation6 + $0x1a8] sm:$0xff]
    %v1234 = vld [vmem:[#allocation6 + $0x1b0] sm:$0xff]
    %v1235 = vld [vmem:[#allocation6 + $0x1b8] sm:$0xff]
    %v1236 = vld [vmem:[#allocation6 + $0x1c0] sm:$0xff]
    %v1237 = vld [vmem:[#allocation6 + $0x1c8] sm:$0xff]
    %v1238 = vld [vmem:[#allocation6 + $0x1d0] sm:$0xff]
    %v1239 = vld [vmem:[#allocation6 + $0x1d8] sm:$0xff]
    %v1240 = vld [vmem:[#allocation6 + $0x1e0] sm:$0xff]
    %v1241 = vld [vmem:[#allocation6 + $0x1e8] sm:$0xff]
    %v1242 = vld [vmem:[#allocation6 + $0x1f0] sm:$0xff]
    %v1243 = vld [vmem:[#allocation6 + $0x1f8] sm:$0xff]
    %v1244 = vld [vmem:[#allocation6 + $0x200] sm:$0xff]
    %v1245 = vld [vmem:[#allocation6 + $0x208] sm:$0xff]
    %v1246 = vld [vmem:[#allocation6 + $0x210] sm:$0xff]
    %v1247 = vld [vmem:[#allocation6 + $0x218] sm:$0xff]
    %v1248 = vld [vmem:[#allocation6 + $0x220] sm:$0xff]
    %v1249 = vld [vmem:[#allocation6 + $0x228] sm:$0xff]
    %v1250 = vld [vmem:[#allocation6 + $0x230] sm:$0xff]
    %v1251 = vld [vmem:[#allocation6 + $0x238] sm:$0xff]
    %v1252 = vld [vmem:[#allocation6 + $0x240] sm:$0xff]
    %v1253 = vld [vmem:[#allocation6 + $0x248] sm:$0xff]
    %v1254 = vld [vmem:[#allocation6 + $0x250] sm:$0xff]
    %v1255 = vld [vmem:[#allocation6 + $0x258] sm:$0xff]
    %v1256 = vld [vmem:[#allocation6 + $0x260] sm:$0xff]
    %v1257 = vld [vmem:[#allocation6 + $0x268] sm:$0xff]
    %v1258 = vld [vmem:[#allocation6 + $0x270] sm:$0xff]
    %v1259 = vld [vmem:[#allocation6 + $0x278] sm:$0xff]
    %v1260 = vld [vmem:[#allocation6 + $0x280] sm:$0xff]
    %v1261 = vld [vmem:[#allocation6 + $0x288] sm:$0xff]
    %v1262 = vld [vmem:[#allocation6 + $0x290] sm:$0xff]
    %v1263 = vld [vmem:[#allocation6 + $0x298] sm:$0xff]
    %v1264 = vld [vmem:[#allocation6 + $0x2a0] sm:$0xff]
    %v1265 = vld [vmem:[#allocation6 + $0x2a8] sm:$0xff]
    %v1266 = vld [vmem:[#allocation6 + $0x2b0] sm:$0xff]
    %v1267 = vld [vmem:[#allocation6 + $0x2b8] sm:$0xff]
    %v1268 = vld [vmem:[#allocation6 + $0x2c0] sm:$0xff]
    %v1269 = vld [vmem:[#allocation6 + $0x2c8] sm:$0xff]
    %v1270 = vld [vmem:[#allocation6 + $0x2d0] sm:$0xff]
    %v1271 = vld [vmem:[#allocation6 + $0x2d8] sm:$0xff]
    %v1272 = vld [vmem:[#allocation6 + $0x2e0] sm:$0xff]
    %v1273 = vld [vmem:[#allocation6 + $0x2e8] sm:$0xff]
    %v1274 = vld [vmem:[#allocation6 + $0x2f0] sm:$0xff]
    %v1275 = vld [vmem:[#allocation6 + $0x2f8] sm:$0xff]
    %v1276 = vld [vmem:[#allocation6 + $0x300] sm:$0xff]
    %v1277 = vld [vmem:[#allocation6 + $0x308] sm:$0xff]
    %v1278 = vld [vmem:[#allocation6 + $0x310] sm:$0xff]
    %v1279 = vld [vmem:[#allocation6 + $0x318] sm:$0xff]
    %v1280 = vld [vmem:[#allocation6 + $0x320] sm:$0xff]
    %v1281 = vld [vmem:[#allocation6 + $0x328] sm:$0xff]
    %v1282 = vld [vmem:[#allocation6 + $0x330] sm:$0xff]
    %v1283 = vld [vmem:[#allocation6 + $0x338] sm:$0xff]
    %v1284 = vld [vmem:[#allocation6 + $0x340] sm:$0xff]
    %v1285 = vld [vmem:[#allocation6 + $0x348] sm:$0xff]
    %v1286 = vld [vmem:[#allocation6 + $0x350] sm:$0xff]
    %v1287 = vld [vmem:[#allocation6 + $0x358] sm:$0xff]
    %v1288 = vld [vmem:[#allocation6 + $0x360] sm:$0xff]
    %v1289 = vld [vmem:[#allocation6 + $0x368] sm:$0xff]
    %v1290 = vld [vmem:[#allocation6 + $0x370] sm:$0xff]
    %v1291 = vld [vmem:[#allocation6 + $0x378] sm:$0xff]
    %v1292 = vunpack.c.l.s8.bf16 %v1180
    %v1293 = vunpack.c.l.s8.bf16 %v1181
    %v1294 = vunpack.c.l.s8.bf16 %v1182
    %v1295 = vunpack.c.l.s8.bf16 %v1183
    %v1296 = vunpack.c.l.s8.bf16 %v1184
    %v1297 = vunpack.c.l.s8.bf16 %v1185
    %v1298 = vunpack.c.l.s8.bf16 %v1186
    %v1299 = vunpack.c.h.s8.bf16 %v1180
    %v1300 = vunpack.c.h.s8.bf16 %v1181
    %v1301 = vunpack.c.h.s8.bf16 %v1182
    %v1302 = vunpack.c.h.s8.bf16 %v1183
    %v1303 = vunpack.c.h.s8.bf16 %v1184
    %v1304 = vunpack.c.h.s8.bf16 %v1185
    %v1305 = vunpack.c.h.s8.bf16 %v1186
    %v1306 = vunpack.c.l.s8.bf16 %v1187
    %v1307 = vunpack.c.l.s8.bf16 %v1188
    %v1308 = vunpack.c.l.s8.bf16 %v1189
    %v1309 = vunpack.c.l.s8.bf16 %v1190
    %v1310 = vunpack.c.l.s8.bf16 %v1191
    %v1311 = vunpack.c.l.s8.bf16 %v1192
    %v1312 = vunpack.c.l.s8.bf16 %v1193
    %v1313 = vunpack.c.h.s8.bf16 %v1187
    %v1314 = vunpack.c.h.s8.bf16 %v1188
    %v1315 = vunpack.c.h.s8.bf16 %v1189
    %v1316 = vunpack.c.h.s8.bf16 %v1190
    %v1317 = vunpack.c.h.s8.bf16 %v1191
    %v1318 = vunpack.c.h.s8.bf16 %v1192
    %v1319 = vunpack.c.h.s8.bf16 %v1193
    %v1320 = vunpack.c.l.s8.bf16 %v1194
    %v1321 = vunpack.c.l.s8.bf16 %v1195
    %v1322 = vunpack.c.l.s8.bf16 %v1196
    %v1323 = vunpack.c.l.s8.bf16 %v1197
    %v1324 = vunpack.c.l.s8.bf16 %v1198
    %v1325 = vunpack.c.l.s8.bf16 %v1199
    %v1326 = vunpack.c.l.s8.bf16 %v1200
    %v1327 = vunpack.c.h.s8.bf16 %v1194
    %v1328 = vunpack.c.h.s8.bf16 %v1195
    %v1329 = vunpack.c.h.s8.bf16 %v1196
    %v1330 = vunpack.c.h.s8.bf16 %v1197
    %v1331 = vunpack.c.h.s8.bf16 %v1198
    %v1332 = vunpack.c.h.s8.bf16 %v1199
    %v1333 = vunpack.c.h.s8.bf16 %v1200
    %v1334 = vunpack.c.l.s8.bf16 %v1201
    %v1335 = vunpack.c.l.s8.bf16 %v1202
    %v1336 = vunpack.c.l.s8.bf16 %v1203
    %v1337 = vunpack.c.l.s8.bf16 %v1204
    %v1338 = vunpack.c.l.s8.bf16 %v1205
    %v1339 = vunpack.c.l.s8.bf16 %v1206
    %v1340 = vunpack.c.l.s8.bf16 %v1207
    %v1341 = vunpack.c.h.s8.bf16 %v1201
    %v1342 = vunpack.c.h.s8.bf16 %v1202
    %v1343 = vunpack.c.h.s8.bf16 %v1203
    %v1344 = vunpack.c.h.s8.bf16 %v1204
    %v1345 = vunpack.c.h.s8.bf16 %v1205
    %v1346 = vunpack.c.h.s8.bf16 %v1206
    %v1347 = vunpack.c.h.s8.bf16 %v1207
    %v1348 = vunpack.c.l.s8.bf16 %v1208
    %v1349 = vunpack.c.l.s8.bf16 %v1209
    %v1350 = vunpack.c.l.s8.bf16 %v1210
    %v1351 = vunpack.c.l.s8.bf16 %v1211
    %v1352 = vunpack.c.l.s8.bf16 %v1212
    %v1353 = vunpack.c.l.s8.bf16 %v1213
    %v1354 = vunpack.c.l.s8.bf16 %v1214
    %v1355 = vunpack.c.h.s8.bf16 %v1208
    %v1356 = vunpack.c.h.s8.bf16 %v1209
    %v1357 = vunpack.c.h.s8.bf16 %v1210
    %v1358 = vunpack.c.h.s8.bf16 %v1211
    %v1359 = vunpack.c.h.s8.bf16 %v1212
    %v1360 = vunpack.c.h.s8.bf16 %v1213
    %v1361 = vunpack.c.h.s8.bf16 %v1214
    %v1362 = vunpack.c.l.s8.bf16 %v1215
    %v1363 = vunpack.c.l.s8.bf16 %v1216
    %v1364 = vunpack.c.l.s8.bf16 %v1217
    %v1365 = vunpack.c.l.s8.bf16 %v1218
    %v1366 = vunpack.c.l.s8.bf16 %v1219
    %v1367 = vunpack.c.l.s8.bf16 %v1220
    %v1368 = vunpack.c.l.s8.bf16 %v1221
    %v1369 = vunpack.c.h.s8.bf16 %v1215
    %v1370 = vunpack.c.h.s8.bf16 %v1216
    %v1371 = vunpack.c.h.s8.bf16 %v1217
    %v1372 = vunpack.c.h.s8.bf16 %v1218
    %v1373 = vunpack.c.h.s8.bf16 %v1219
    %v1374 = vunpack.c.h.s8.bf16 %v1220
    %v1375 = vunpack.c.h.s8.bf16 %v1221
    %v1376 = vunpack.c.l.s8.bf16 %v1222
    %v1377 = vunpack.c.l.s8.bf16 %v1223
    %v1378 = vunpack.c.l.s8.bf16 %v1224
    %v1379 = vunpack.c.l.s8.bf16 %v1225
    %v1380 = vunpack.c.l.s8.bf16 %v1226
    %v1381 = vunpack.c.l.s8.bf16 %v1227
    %v1382 = vunpack.c.l.s8.bf16 %v1228
    %v1383 = vunpack.c.h.s8.bf16 %v1222
    %v1384 = vunpack.c.h.s8.bf16 %v1223
    %v1385 = vunpack.c.h.s8.bf16 %v1224
    %v1386 = vunpack.c.h.s8.bf16 %v1225
    %v1387 = vunpack.c.h.s8.bf16 %v1226
    %v1388 = vunpack.c.h.s8.bf16 %v1227
    %v1389 = vunpack.c.h.s8.bf16 %v1228
    %v1390 = vunpack.c.l.s8.bf16 %v1229
    %v1391 = vunpack.c.l.s8.bf16 %v1230
    %v1392 = vunpack.c.l.s8.bf16 %v1231
    %v1393 = vunpack.c.l.s8.bf16 %v1232
    %v1394 = vunpack.c.l.s8.bf16 %v1233
    %v1395 = vunpack.c.l.s8.bf16 %v1234
    %v1396 = vunpack.c.l.s8.bf16 %v1235
    %v1397 = vunpack.c.h.s8.bf16 %v1229
    %v1398 = vunpack.c.h.s8.bf16 %v1230
    %v1399 = vunpack.c.h.s8.bf16 %v1231
    %v1400 = vunpack.c.h.s8.bf16 %v1232
    %v1401 = vunpack.c.h.s8.bf16 %v1233
    %v1402 = vunpack.c.h.s8.bf16 %v1234
    %v1403 = vunpack.c.h.s8.bf16 %v1235
    %v1404 = vunpack.c.l.s8.bf16 %v1236
    %v1405 = vunpack.c.l.s8.bf16 %v1237
    %v1406 = vunpack.c.l.s8.bf16 %v1238
    %v1407 = vunpack.c.l.s8.bf16 %v1239
    %v1408 = vunpack.c.l.s8.bf16 %v1240
    %v1409 = vunpack.c.l.s8.bf16 %v1241
    %v1410 = vunpack.c.l.s8.bf16 %v1242
    %v1411 = vunpack.c.h.s8.bf16 %v1236
    %v1412 = vunpack.c.h.s8.bf16 %v1237
    %v1413 = vunpack.c.h.s8.bf16 %v1238
    %v1414 = vunpack.c.h.s8.bf16 %v1239
    %v1415 = vunpack.c.h.s8.bf16 %v1240
    %v1416 = vunpack.c.h.s8.bf16 %v1241
    %v1417 = vunpack.c.h.s8.bf16 %v1242
    %v1418 = vunpack.c.l.s8.bf16 %v1243
    %v1419 = vunpack.c.l.s8.bf16 %v1244
    %v1420 = vunpack.c.l.s8.bf16 %v1245
    %v1421 = vunpack.c.l.s8.bf16 %v1246
    %v1422 = vunpack.c.l.s8.bf16 %v1247
    %v1423 = vunpack.c.l.s8.bf16 %v1248
    %v1424 = vunpack.c.l.s8.bf16 %v1249
    %v1425 = vunpack.c.h.s8.bf16 %v1243
    %v1426 = vunpack.c.h.s8.bf16 %v1244
    %v1427 = vunpack.c.h.s8.bf16 %v1245
    %v1428 = vunpack.c.h.s8.bf16 %v1246
    %v1429 = vunpack.c.h.s8.bf16 %v1247
    %v1430 = vunpack.c.h.s8.bf16 %v1248
    %v1431 = vunpack.c.h.s8.bf16 %v1249
    %v1432 = vunpack.c.l.s8.bf16 %v1250
    %v1433 = vunpack.c.l.s8.bf16 %v1251
    %v1434 = vunpack.c.l.s8.bf16 %v1252
    %v1435 = vunpack.c.l.s8.bf16 %v1253
    %v1436 = vunpack.c.l.s8.bf16 %v1254
    %v1437 = vunpack.c.l.s8.bf16 %v1255
    %v1438 = vunpack.c.l.s8.bf16 %v1256
    %v1439 = vunpack.c.h.s8.bf16 %v1250
    %v1440 = vunpack.c.h.s8.bf16 %v1251
    %v1441 = vunpack.c.h.s8.bf16 %v1252
    %v1442 = vunpack.c.h.s8.bf16 %v1253
    %v1443 = vunpack.c.h.s8.bf16 %v1254
    %v1444 = vunpack.c.h.s8.bf16 %v1255
    %v1445 = vunpack.c.h.s8.bf16 %v1256
    %v1446 = vunpack.c.l.s8.bf16 %v1257
    %v1447 = vunpack.c.l.s8.bf16 %v1258
    %v1448 = vunpack.c.l.s8.bf16 %v1259
    %v1449 = vunpack.c.l.s8.bf16 %v1260
    %v1450 = vunpack.c.l.s8.bf16 %v1261
    %v1451 = vunpack.c.l.s8.bf16 %v1262
    %v1452 = vunpack.c.l.s8.bf16 %v1263
    %v1453 = vunpack.c.h.s8.bf16 %v1257
    %v1454 = vunpack.c.h.s8.bf16 %v1258
    %v1455 = vunpack.c.h.s8.bf16 %v1259
    %v1456 = vunpack.c.h.s8.bf16 %v1260
    %v1457 = vunpack.c.h.s8.bf16 %v1261
    %v1458 = vunpack.c.h.s8.bf16 %v1262
    %v1459 = vunpack.c.h.s8.bf16 %v1263
    %v1460 = vunpack.c.l.s8.bf16 %v1264
    %v1461 = vunpack.c.l.s8.bf16 %v1265
    %v1462 = vunpack.c.l.s8.bf16 %v1266
    %v1463 = vunpack.c.l.s8.bf16 %v1267
    %v1464 = vunpack.c.l.s8.bf16 %v1268
    %v1465 = vunpack.c.l.s8.bf16 %v1269
    %v1466 = vunpack.c.l.s8.bf16 %v1270
    %v1467 = vunpack.c.h.s8.bf16 %v1264
    %v1468 = vunpack.c.h.s8.bf16 %v1265
    %v1469 = vunpack.c.h.s8.bf16 %v1266
    %v1470 = vunpack.c.h.s8.bf16 %v1267
    %v1471 = vunpack.c.h.s8.bf16 %v1268
    %v1472 = vunpack.c.h.s8.bf16 %v1269
    %v1473 = vunpack.c.h.s8.bf16 %v1270
    %v1474 = vunpack.c.l.s8.bf16 %v1271
    %v1475 = vunpack.c.l.s8.bf16 %v1272
    %v1476 = vunpack.c.l.s8.bf16 %v1273
    %v1477 = vunpack.c.l.s8.bf16 %v1274
    %v1478 = vunpack.c.l.s8.bf16 %v1275
    %v1479 = vunpack.c.l.s8.bf16 %v1276
    %v1480 = vunpack.c.l.s8.bf16 %v1277
    %v1481 = vunpack.c.h.s8.bf16 %v1271
    %v1482 = vunpack.c.h.s8.bf16 %v1272
    %v1483 = vunpack.c.h.s8.bf16 %v1273
    %v1484 = vunpack.c.h.s8.bf16 %v1274
    %v1485 = vunpack.c.h.s8.bf16 %v1275
    %v1486 = vunpack.c.h.s8.bf16 %v1276
    %v1487 = vunpack.c.h.s8.bf16 %v1277
    %v1488 = vunpack.c.l.s8.bf16 %v1278
    %v1489 = vunpack.c.l.s8.bf16 %v1279
    %v1490 = vunpack.c.l.s8.bf16 %v1280
    %v1491 = vunpack.c.l.s8.bf16 %v1281
    %v1492 = vunpack.c.l.s8.bf16 %v1282
    %v1493 = vunpack.c.l.s8.bf16 %v1283
    %v1494 = vunpack.c.l.s8.bf16 %v1284
    %v1495 = vunpack.c.h.s8.bf16 %v1278
    %v1496 = vunpack.c.h.s8.bf16 %v1279
    %v1497 = vunpack.c.h.s8.bf16 %v1280
    %v1498 = vunpack.c.h.s8.bf16 %v1281
    %v1499 = vunpack.c.h.s8.bf16 %v1282
    %v1500 = vunpack.c.h.s8.bf16 %v1283
    %v1501 = vunpack.c.h.s8.bf16 %v1284
    %v1502 = vunpack.c.l.s8.bf16 %v1285
    %v1503 = vunpack.c.l.s8.bf16 %v1286
    %v1504 = vunpack.c.l.s8.bf16 %v1287
    %v1505 = vunpack.c.l.s8.bf16 %v1288
    %v1506 = vunpack.c.l.s8.bf16 %v1289
    %v1507 = vunpack.c.l.s8.bf16 %v1290
    %v1508 = vunpack.c.l.s8.bf16 %v1291
    %v1509 = vunpack.c.h.s8.bf16 %v1285
    %v1510 = vunpack.c.h.s8.bf16 %v1286
    %v1511 = vunpack.c.h.s8.bf16 %v1287
    %v1512 = vunpack.c.h.s8.bf16 %v1288
    %v1513 = vunpack.c.h.s8.bf16 %v1289
    %v1514 = vunpack.c.h.s8.bf16 %v1290
    %v1515 = vunpack.c.h.s8.bf16 %v1291
    %v1516 = vpack.c.bf16 %v1176, %v1172
    %v1517 = vpack.c.bf16 %v1177, %v1173
    %v1518 = vpack.c.bf16 %v1178, %v1174
    %v1519 = vpack.c.bf16 %v1179, %v1175
    %1520 = vmatprep.subr.bf16.mxu0 %v1293
    %1521 = vmatpush1.bf16.msra.mxu0 %v1292
    %1522 = vmatprep.subr.bf16.mxu0 %v1300
    %1523 = vmatpush1.bf16.msra.mxu0 %v1299
    %1524 = vmatprep.subr.bf16.mxu0 %v1307
    %1525 = vmatpush1.bf16.msra.mxu0 %v1306
    %1526 = vmatprep.subr.bf16.mxu0 %v1314
    %1527 = vmatpush1.bf16.msra.mxu0 %v1313
    %1528 = vmatprep.subr.bf16.mxu0 %v1321
    %1529 = vmatpush1.bf16.msra.mxu0 %v1320
    %1530 = vmatprep.subr.bf16.mxu0 %v1328
    %1531 = vmatpush1.bf16.msra.mxu0 %v1327
    %1532 = vmatprep.subr.bf16.mxu0 %v1335
    %1533 = vmatpush1.bf16.msra.mxu0 %v1334
    %1534 = vmatprep.subr.bf16.mxu0 %v1342
    %1535 = vmatpush1.bf16.msra.mxu0 %v1341
    %1536 = vmatprep.subr.bf16.mxu0 %v1349
    %1537 = vmatpush1.bf16.msra.mxu0 %v1348
    %1538 = vmatprep.subr.bf16.mxu0 %v1356
    %1539 = vmatpush1.bf16.msra.mxu0 %v1355
    %1540 = vmatprep.subr.bf16.mxu0 %v1363
    %1541 = vmatpush1.bf16.msra.mxu0 %v1362
    %1542 = vmatprep.subr.bf16.mxu0 %v1370
    %1543 = vmatpush1.bf16.msra.mxu0 %v1369
    %1544 = vmatprep.subr.bf16.mxu0 %v1377
    %1545 = vmatpush1.bf16.msra.mxu0 %v1376
    %1546 = vmatprep.subr.bf16.mxu0 %v1384
    %1547 = vmatpush1.bf16.msra.mxu0 %v1383
    %1548 = vmatprep.subr.bf16.mxu0 %v1391
    %1549 = vmatpush1.bf16.msra.mxu0 %v1390
    %1550 = vmatprep.subr.bf16.mxu0 %v1398
    %1551 = vmatpush1.bf16.msra.mxu0 %v1397
    %1552 = vmatprep.mubr.bf16.mxu0 %v1517
    %1553 = vmatmul.mubr.bf16.gmra.mrb[0].mxu0 %v1516
    %v1554 = vpop.f32.mrb[0].mxu0
    %v1555 = vadd.f32 0.0, %v1554
    %v1556 = vpop.f32.mrb[0].mxu0
    %v1557 = vadd.f32 0.0, %v1556
    %v1558 = vpop.f32.mrb[0].mxu0
    %v1559 = vadd.f32 0.0, %v1558
    %v1560 = vpop.f32.mrb[0].mxu0
    %v1561 = vadd.f32 0.0, %v1560
    %1562 = vdwg.mxu0
    %1563 = vmatprep.subr.bf16.mxu0 %v1405
    %1564 = vmatpush1.bf16.msra.mxu0 %v1404
    %1565 = vmatprep.subr.bf16.mxu0 %v1412
    %1566 = vmatpush1.bf16.msra.mxu0 %v1411
    %1567 = vmatprep.subr.bf16.mxu0 %v1419
    %1568 = vmatpush1.bf16.msra.mxu0 %v1418
    %1569 = vmatprep.subr.bf16.mxu0 %v1426
    %1570 = vmatpush1.bf16.msra.mxu0 %v1425
    %1571 = vmatprep.subr.bf16.mxu0 %v1433
    %1572 = vmatpush1.bf16.msra.mxu0 %v1432
    %1573 = vmatprep.subr.bf16.mxu0 %v1440
    %1574 = vmatpush1.bf16.msra.mxu0 %v1439
    %1575 = vmatprep.subr.bf16.mxu0 %v1447
    %1576 = vmatpush1.bf16.msra.mxu0 %v1446
    %1577 = vmatprep.subr.bf16.mxu0 %v1454
    %1578 = vmatpush1.bf16.msra.mxu0 %v1453
    %1579 = vmatprep.subr.bf16.mxu0 %v1461
    %1580 = vmatpush1.bf16.msra.mxu0 %v1460
    %1581 = vmatprep.subr.bf16.mxu0 %v1468
    %1582 = vmatpush1.bf16.msra.mxu0 %v1467
    %1583 = vmatprep.subr.bf16.mxu0 %v1475
    %1584 = vmatpush1.bf16.msra.mxu0 %v1474
    %1585 = vmatprep.subr.bf16.mxu0 %v1482
    %1586 = vmatpush1.bf16.msra.mxu0 %v1481
    %1587 = vmatprep.subr.bf16.mxu0 %v1489
    %1588 = vmatpush1.bf16.msra.mxu0 %v1488
    %1589 = vmatprep.subr.bf16.mxu0 %v1496
    %1590 = vmatpush1.bf16.msra.mxu0 %v1495
    %1591 = vmatprep.subr.bf16.mxu0 %v1503
    %1592 = vmatpush1.bf16.msra.mxu0 %v1502
    %1593 = vmatprep.subr.bf16.mxu0 %v1510
    %1594 = vmatpush1.bf16.msra.mxu0 %v1509
    %1595 = vmatprep.mubr.bf16.mxu0 %v1519
    %1596 = vmatmul.mubr.bf16.gmra.mrb[0].mxu0 %v1518
    %v1597 = vpop.f32.mrb[0].mxu0
    %v1598 = vadd.f32 %v1555, %v1597
    %v1599 = vpop.f32.mrb[0].mxu0
    %v1600 = vadd.f32 %v1557, %v1599
    %v1601 = vpop.f32.mrb[0].mxu0
    %v1602 = vadd.f32 %v1559, %v1601
    %v1603 = vpop.f32.mrb[0].mxu0
    %v1604 = vadd.f32 %v1561, %v1603
    %1605 = vdwg.mxu0
    %1606 = vmatprep.subr.bf16.mxu0 %v1295
    %1607 = vmatpush1.bf16.msra.mxu0 %v1294
    %1608 = vmatprep.subr.bf16.mxu0 %v1302
    %1609 = vmatpush1.bf16.msra.mxu0 %v1301
    %1610 = vmatprep.subr.bf16.mxu0 %v1309
    %1611 = vmatpush1.bf16.msra.mxu0 %v1308
    %1612 = vmatprep.subr.bf16.mxu0 %v1316
    %1613 = vmatpush1.bf16.msra.mxu0 %v1315
    %1614 = vmatprep.subr.bf16.mxu0 %v1323
    %1615 = vmatpush1.bf16.msra.mxu0 %v1322
    %1616 = vmatprep.subr.bf16.mxu0 %v1330
    %1617 = vmatpush1.bf16.msra.mxu0 %v1329
    %1618 = vmatprep.subr.bf16.mxu0 %v1337
    %1619 = vmatpush1.bf16.msra.mxu0 %v1336
    %1620 = vmatprep.subr.bf16.mxu0 %v1344
    %1621 = vmatpush1.bf16.msra.mxu0 %v1343
    %1622 = vmatprep.subr.bf16.mxu0 %v1351
    %1623 = vmatpush1.bf16.msra.mxu0 %v1350
    %1624 = vmatprep.subr.bf16.mxu0 %v1358
    %1625 = vmatpush1.bf16.msra.mxu0 %v1357
    %1626 = vmatprep.subr.bf16.mxu0 %v1365
    %1627 = vmatpush1.bf16.msra.mxu0 %v1364
    %1628 = vmatprep.subr.bf16.mxu0 %v1372
    %1629 = vmatpush1.bf16.msra.mxu0 %v1371
    %1630 = vmatprep.subr.bf16.mxu0 %v1379
    %1631 = vmatpush1.bf16.msra.mxu0 %v1378
    %1632 = vmatprep.subr.bf16.mxu0 %v1386
    %1633 = vmatpush1.bf16.msra.mxu0 %v1385
    %1634 = vmatprep.subr.bf16.mxu0 %v1393
    %1635 = vmatpush1.bf16.msra.mxu0 %v1392
    %1636 = vmatprep.subr.bf16.mxu0 %v1400
    %1637 = vmatpush1.bf16.msra.mxu0 %v1399
    %1638 = vmatprep.mubr.bf16.mxu0 %v1517
    %1639 = vmatmul.mubr.bf16.gmra.mrb[0].mxu0 %v1516
    %v1640 = vpop.f32.mrb[0].mxu0
    %v1641 = vadd.f32 0.0, %v1640
    %v1642 = vpop.f32.mrb[0].mxu0
    %v1643 = vadd.f32 0.0, %v1642
    %v1644 = vpop.f32.mrb[0].mxu0
    %v1645 = vadd.f32 0.0, %v1644
    %v1646 = vpop.f32.mrb[0].mxu0
    %v1647 = vadd.f32 0.0, %v1646
    %1648 = vdwg.mxu0
    %1649 = vmatprep.subr.bf16.mxu0 %v1407
    %1650 = vmatpush1.bf16.msra.mxu0 %v1406
    %1651 = vmatprep.subr.bf16.mxu0 %v1414
    %1652 = vmatpush1.bf16.msra.mxu0 %v1413
    %1653 = vmatprep.subr.bf16.mxu0 %v1421
    %1654 = vmatpush1.bf16.msra.mxu0 %v1420
    %1655 = vmatprep.subr.bf16.mxu0 %v1428
    %1656 = vmatpush1.bf16.msra.mxu0 %v1427
    %1657 = vmatprep.subr.bf16.mxu0 %v1435
    %1658 = vmatpush1.bf16.msra.mxu0 %v1434
    %1659 = vmatprep.subr.bf16.mxu0 %v1442
    %1660 = vmatpush1.bf16.msra.mxu0 %v1441
    %1661 = vmatprep.subr.bf16.mxu0 %v1449
    %1662 = vmatpush1.bf16.msra.mxu0 %v1448
    %1663 = vmatprep.subr.bf16.mxu0 %v1456
    %1664 = vmatpush1.bf16.msra.mxu0 %v1455
    %1665 = vmatprep.subr.bf16.mxu0 %v1463
    %1666 = vmatpush1.bf16.msra.mxu0 %v1462
    %1667 = vmatprep.subr.bf16.mxu0 %v1470
    %1668 = vmatpush1.bf16.msra.mxu0 %v1469
    %1669 = vmatprep.subr.bf16.mxu0 %v1477
    %1670 = vmatpush1.bf16.msra.mxu0 %v1476
    %1671 = vmatprep.subr.bf16.mxu0 %v1484
    %1672 = vmatpush1.bf16.msra.mxu0 %v1483
    %1673 = vmatprep.subr.bf16.mxu0 %v1491
    %1674 = vmatpush1.bf16.msra.mxu0 %v1490
    %1675 = vmatprep.subr.bf16.mxu0 %v1498
    %1676 = vmatpush1.bf16.msra.mxu0 %v1497
    %1677 = vmatprep.subr.bf16.mxu0 %v1505
    %1678 = vmatpush1.bf16.msra.mxu0 %v1504
    %1679 = vmatprep.subr.bf16.mxu0 %v1512
    %1680 = vmatpush1.bf16.msra.mxu0 %v1511
    %1681 = vmatprep.mubr.bf16.mxu0 %v1519
    %1682 = vmatmul.mubr.bf16.gmra.mrb[0].mxu0 %v1518
    %v1683 = vpop.f32.mrb[0].mxu0
    %v1684 = vadd.f32 %v1641, %v1683
    %v1685 = vpop.f32.mrb[0].mxu0
    %v1686 = vadd.f32 %v1643, %v1685
    %v1687 = vpop.f32.mrb[0].mxu0
    %v1688 = vadd.f32 %v1645, %v1687
    %v1689 = vpop.f32.mrb[0].mxu0
    %v1690 = vadd.f32 %v1647, %v1689
    %1691 = vdwg.mxu0
    %1692 = vmatprep.subr.bf16.mxu0 %v1297
    %1693 = vmatpush1.bf16.msra.mxu0 %v1296
    %1694 = vmatprep.subr.bf16.mxu0 %v1304
    %1695 = vmatpush1.bf16.msra.mxu0 %v1303
    %1696 = vmatprep.subr.bf16.mxu0 %v1311
    %1697 = vmatpush1.bf16.msra.mxu0 %v1310
    %1698 = vmatprep.subr.bf16.mxu0 %v1318
    %1699 = vmatpush1.bf16.msra.mxu0 %v1317
    %1700 = vmatprep.subr.bf16.mxu0 %v1325
    %1701 = vmatpush1.bf16.msra.mxu0 %v1324
    %1702 = vmatprep.subr.bf16.mxu0 %v1332
    %1703 = vmatpush1.bf16.msra.mxu0 %v1331
    %1704 = vmatprep.subr.bf16.mxu0 %v1339
    %1705 = vmatpush1.bf16.msra.mxu0 %v1338
    %1706 = vmatprep.subr.bf16.mxu0 %v1346
    %1707 = vmatpush1.bf16.msra.mxu0 %v1345
    %1708 = vmatprep.subr.bf16.mxu0 %v1353
    %1709 = vmatpush1.bf16.msra.mxu0 %v1352
    %1710 = vmatprep.subr.bf16.mxu0 %v1360
    %1711 = vmatpush1.bf16.msra.mxu0 %v1359
    %1712 = vmatprep.subr.bf16.mxu0 %v1367
    %1713 = vmatpush1.bf16.msra.mxu0 %v1366
    %1714 = vmatprep.subr.bf16.mxu0 %v1374
    %1715 = vmatpush1.bf16.msra.mxu0 %v1373
    %1716 = vmatprep.subr.bf16.mxu0 %v1381
    %1717 = vmatpush1.bf16.msra.mxu0 %v1380
    %1718 = vmatprep.subr.bf16.mxu0 %v1388
    %1719 = vmatpush1.bf16.msra.mxu0 %v1387
    %1720 = vmatprep.subr.bf16.mxu0 %v1395
    %1721 = vmatpush1.bf16.msra.mxu0 %v1394
    %1722 = vmatprep.subr.bf16.mxu0 %v1402
    %1723 = vmatpush1.bf16.msra.mxu0 %v1401
    %1724 = vmatprep.mubr.bf16.mxu0 %v1517
    %1725 = vmatmul.mubr.bf16.gmra.mrb[0].mxu0 %v1516
    %v1726 = vpop.f32.mrb[0].mxu0
    %v1727 = vadd.f32 0.0, %v1726
    %v1728 = vpop.f32.mrb[0].mxu0
    %v1729 = vadd.f32 0.0, %v1728
    %v1730 = vpop.f32.mrb[0].mxu0
    %v1731 = vadd.f32 0.0, %v1730
    %v1732 = vpop.f32.mrb[0].mxu0
    %v1733 = vadd.f32 0.0, %v1732
    %1734 = vdwg.mxu0
    %1735 = vmatprep.subr.bf16.mxu0 %v1409
    %1736 = vmatpush1.bf16.msra.mxu0 %v1408
    %1737 = vmatprep.subr.bf16.mxu0 %v1416
    %1738 = vmatpush1.bf16.msra.mxu0 %v1415
    %1739 = vmatprep.subr.bf16.mxu0 %v1423
    %1740 = vmatpush1.bf16.msra.mxu0 %v1422
    %1741 = vmatprep.subr.bf16.mxu0 %v1430
    %1742 = vmatpush1.bf16.msra.mxu0 %v1429
    %1743 = vmatprep.subr.bf16.mxu0 %v1437
    %1744 = vmatpush1.bf16.msra.mxu0 %v1436
    %1745 = vmatprep.subr.bf16.mxu0 %v1444
    %1746 = vmatpush1.bf16.msra.mxu0 %v1443
    %1747 = vmatprep.subr.bf16.mxu0 %v1451
    %1748 = vmatpush1.bf16.msra.mxu0 %v1450
    %1749 = vmatprep.subr.bf16.mxu0 %v1458
    %1750 = vmatpush1.bf16.msra.mxu0 %v1457
    %1751 = vmatprep.subr.bf16.mxu0 %v1465
    %1752 = vmatpush1.bf16.msra.mxu0 %v1464
    %1753 = vmatprep.subr.bf16.mxu0 %v1472
    %1754 = vmatpush1.bf16.msra.mxu0 %v1471
    %1755 = vmatprep.subr.bf16.mxu0 %v1479
    %1756 = vmatpush1.bf16.msra.mxu0 %v1478
    %1757 = vmatprep.subr.bf16.mxu0 %v1486
    %1758 = vmatpush1.bf16.msra.mxu0 %v1485
    %1759 = vmatprep.subr.bf16.mxu0 %v1493
    %1760 = vmatpush1.bf16.msra.mxu0 %v1492
    %1761 = vmatprep.subr.bf16.mxu0 %v1500
    %1762 = vmatpush1.bf16.msra.mxu0 %v1499
    %1763 = vmatprep.subr.bf16.mxu0 %v1507
    %1764 = vmatpush1.bf16.msra.mxu0 %v1506
    %1765 = vmatprep.subr.bf16.mxu0 %v1514
    %1766 = vmatpush1.bf16.msra.mxu0 %v1513
    %1767 = vmatprep.mubr.bf16.mxu0 %v1519
    %1768 = vmatmul.mubr.bf16.gmra.mrb[0].mxu0 %v1518
    %v1769 = vpop.f32.mrb[0].mxu0
    %v1770 = vadd.f32 %v1727, %v1769
    %v1771 = vpop.f32.mrb[0].mxu0
    %v1772 = vadd.f32 %v1729, %v1771
    %v1773 = vpop.f32.mrb[0].mxu0
    %v1774 = vadd.f32 %v1731, %v1773
    %v1775 = vpop.f32.mrb[0].mxu0
    %v1776 = vadd.f32 %v1733, %v1775
    %1777 = vdwg.mxu0
    %1778 = vmatprep.subr.bf16.mxu0 0
    %1779 = vmatpush1.bf16.msra.mxu0 %v1298
    %1780 = vmatprep.subr.bf16.mxu0 0
    %1781 = vmatpush1.bf16.msra.mxu0 %v1305
    %1782 = vmatprep.subr.bf16.mxu0 0
    %1783 = vmatpush1.bf16.msra.mxu0 %v1312
    %1784 = vmatprep.subr.bf16.mxu0 0
    %1785 = vmatpush1.bf16.msra.mxu0 %v1319
    %1786 = vmatprep.subr.bf16.mxu0 0
    %1787 = vmatpush1.bf16.msra.mxu0 %v1326
    %1788 = vmatprep.subr.bf16.mxu0 0
    %1789 = vmatpush1.bf16.msra.mxu0 %v1333
    %1790 = vmatprep.subr.bf16.mxu0 0
    %1791 = vmatpush1.bf16.msra.mxu0 %v1340
    %1792 = vmatprep.subr.bf16.mxu0 0
    %1793 = vmatpush1.bf16.msra.mxu0 %v1347
    %1794 = vmatprep.subr.bf16.mxu0 0
    %1795 = vmatpush1.bf16.msra.mxu0 %v1354
    %1796 = vmatprep.subr.bf16.mxu0 0
    %1797 = vmatpush1.bf16.msra.mxu0 %v1361
    %1798 = vmatprep.subr.bf16.mxu0 0
    %1799 = vmatpush1.bf16.msra.mxu0 %v1368
    %1800 = vmatprep.subr.bf16.mxu0 0
    %1801 = vmatpush1.bf16.msra.mxu0 %v1375
    %1802 = vmatprep.subr.bf16.mxu0 0
    %1803 = vmatpush1.bf16.msra.mxu0 %v1382
    %1804 = vmatprep.subr.bf16.mxu0 0
    %1805 = vmatpush1.bf16.msra.mxu0 %v1389
    %1806 = vmatprep.subr.bf16.mxu0 0
    %1807 = vmatpush1.bf16.msra.mxu0 %v1396
    %1808 = vmatprep.subr.bf16.mxu0 0
    %1809 = vmatpush1.bf16.msra.mxu0 %v1403
    %1810 = vmatprep.mubr.bf16.mxu0 %v1517
    %1811 = vmatmul.mubr.bf16.gmra.mrb[0].mxu0 %v1516
    %v1812 = vpop.f32.mrb[0].mxu0
    %v1813 = vadd.f32 0.0, %v1812
    %v1814 = vpop.f32.mrb[0].mxu0
    %v1815 = vpop.f32.mrb[0].mxu0
    %v1816 = vadd.f32 0.0, %v1815
    %v1817 = vpop.f32.mrb[0].mxu0
    %1818 = vdwg.mxu0
    %1819 = vmatprep.subr.bf16.mxu0 0
    %1820 = vmatpush1.bf16.msra.mxu0 %v1410
    %1821 = vmatprep.subr.bf16.mxu0 0
    %1822 = vmatpush1.bf16.msra.mxu0 %v1417
    %1823 = vmatprep.subr.bf16.mxu0 0
    %1824 = vmatpush1.bf16.msra.mxu0 %v1424
    %1825 = vmatprep.subr.bf16.mxu0 0
    %1826 = vmatpush1.bf16.msra.mxu0 %v1431
    %1827 = vmatprep.subr.bf16.mxu0 0
    %1828 = vmatpush1.bf16.msra.mxu0 %v1438
    %1829 = vmatprep.subr.bf16.mxu0 0
    %1830 = vmatpush1.bf16.msra.mxu0 %v1445
    %1831 = vmatprep.subr.bf16.mxu0 0
    %1832 = vmatpush1.bf16.msra.mxu0 %v1452
    %1833 = vmatprep.subr.bf16.mxu0 0
    %1834 = vmatpush1.bf16.msra.mxu0 %v1459
    %1835 = vmatprep.subr.bf16.mxu0 0
    %1836 = vmatpush1.bf16.msra.mxu0 %v1466
    %1837 = vmatprep.subr.bf16.mxu0 0
    %1838 = vmatpush1.bf16.msra.mxu0 %v1473
    %1839 = vmatprep.subr.bf16.mxu0 0
    %1840 = vmatpush1.bf16.msra.mxu0 %v1480
    %1841 = vmatprep.subr.bf16.mxu0 0
    %1842 = vmatpush1.bf16.msra.mxu0 %v1487
    %1843 = vmatprep.subr.bf16.mxu0 0
    %1844 = vmatpush1.bf16.msra.mxu0 %v1494
    %1845 = vmatprep.subr.bf16.mxu0 0
    %1846 = vmatpush1.bf16.msra.mxu0 %v1501
    %1847 = vmatprep.subr.bf16.mxu0 0
    %1848 = vmatpush1.bf16.msra.mxu0 %v1508
    %1849 = vmatprep.subr.bf16.mxu0 0
    %1850 = vmatpush1.bf16.msra.mxu0 %v1515
    %1851 = vmatprep.mubr.bf16.mxu0 %v1519
    %1852 = vmatmul.mubr.bf16.gmra.mrb[0].mxu0 %v1518
    %v1853 = vpop.f32.mrb[0].mxu0
    %v1854 = vadd.f32 %v1813, %v1853
    %v1855 = vpop.f32.mrb[0].mxu0
    %v1856 = vpop.f32.mrb[0].mxu0
    %v1857 = vadd.f32 %v1816, %v1856
    %v1858 = vpop.f32.mrb[0].mxu0
    %1859 = vdwg.mxu0
    %s1860 = scalar_lea.vmem %s6, 17
    %v1861 = vld [vmem:[%s1860] ss:$2 sm:$0xff]
    %v1863 = vlaneseq
    %v1864 = vshrl.u32 %v1863, 7
    %v1865 = vsub.s32 0, %v1864
    %v1866 = vrot.slane %v1861, %v1865
    %v1867 = vlaneseq
    %v1868 = vshrl.u32 %v1867, 7
    %v1869 = vsub.s32 1, %v1868
    %v1870 = vrot.slane %v1861, %v1869
    %v1871 = vlaneseq
    %v1872 = vshrl.u32 %v1871, 7
    %v1873 = vsub.s32 2, %v1872
    %v1874 = vrot.slane %v1861, %v1873
    %v1875 = vlaneseq
    %v1876 = vshrl.u32 %v1875, 7
    %v1877 = vsub.s32 3, %v1876
    %v1878 = vrot.slane %v1861, %v1877
    %v1879 = vlaneseq
    %v1880 = vshrl.u32 %v1879, 7
    %v1881 = vsub.s32 4, %v1880
    %v1882 = vrot.slane %v1861, %v1881
    %v1883 = vlaneseq
    %v1884 = vshrl.u32 %v1883, 7
    %v1885 = vsub.s32 5, %v1884
    %v1886 = vrot.slane %v1861, %v1885
    %v1887 = vlaneseq
    %v1888 = vshrl.u32 %v1887, 7
    %v1889 = vsub.s32 6, %v1888
    %v1890 = vrot.slane %v1861, %v1889
    %v1898 = vmul.f32 %v1598, %v1866
    %v1899 = vmul.f32 %v1600, %v1870
    %v1900 = vmul.f32 %v1684, %v1874
    %v1901 = vmul.f32 %v1686, %v1878
    %v1902 = vmul.f32 %v1770, %v1882
    %v1903 = vmul.f32 %v1772, %v1886
    %v1904 = vmul.f32 %v1854, %v1890
    %v1905 = vmul.f32 %v1602, %v1866
    %v1906 = vmul.f32 %v1604, %v1870
    %v1907 = vmul.f32 %v1688, %v1874
    %v1908 = vmul.f32 %v1690, %v1878
    %v1909 = vmul.f32 %v1774, %v1882
    %v1910 = vmul.f32 %v1776, %v1886
    %v1911 = vmul.f32 %v1857, %v1890
    %s1912 = scalar_lea.vmem %s6, 16
    %v1913 = vld [vmem:[%s1912] ss:$2 sm:$0xff]
    %v1915 = vlaneseq
    %v1916 = vshrl.u32 %v1915, 7
    %v1917 = vsub.s32 0, %v1916
    %v1918 = vrot.slane %v1913, %v1917
    %v1919 = vlaneseq
    %v1920 = vshrl.u32 %v1919, 7
    %v1921 = vsub.s32 1, %v1920
    %v1922 = vrot.slane %v1913, %v1921
    %v1923 = vlaneseq
    %v1924 = vshrl.u32 %v1923, 7
    %v1925 = vsub.s32 2, %v1924
    %v1926 = vrot.slane %v1913, %v1925
    %v1927 = vlaneseq
    %v1928 = vshrl.u32 %v1927, 7
    %v1929 = vsub.s32 3, %v1928
    %v1930 = vrot.slane %v1913, %v1929
    %v1931 = vlaneseq
    %v1932 = vshrl.u32 %v1931, 7
    %v1933 = vsub.s32 4, %v1932
    %v1934 = vrot.slane %v1913, %v1933
    %v1935 = vlaneseq
    %v1936 = vshrl.u32 %v1935, 7
    %v1937 = vsub.s32 5, %v1936
    %v1938 = vrot.slane %v1913, %v1937
    %v1939 = vlaneseq
    %v1940 = vshrl.u32 %v1939, 7
    %v1941 = vsub.s32 6, %v1940
    %v1942 = vrot.slane %v1913, %v1941
    %v1950 = vadd.f32 %v1898, %v1918
    %v1951 = vadd.f32 %v1899, %v1922
    %v1952 = vadd.f32 %v1900, %v1926
    %v1953 = vadd.f32 %v1901, %v1930
    %v1954 = vadd.f32 %v1902, %v1934
    %v1955 = vadd.f32 %v1903, %v1938
    %v1956 = vadd.f32 %v1904, %v1942
    %v1957 = vadd.f32 %v1905, %v1918
    %v1958 = vadd.f32 %v1906, %v1922
    %v1959 = vadd.f32 %v1907, %v1926
    %v1960 = vadd.f32 %v1908, %v1930
    %v1961 = vadd.f32 %v1909, %v1934
    %v1962 = vadd.f32 %v1910, %v1938
    %v1963 = vadd.f32 %v1911, %v1942
    %v1964 = vtanh.pop %v1950
    %v1965 = vtanh.pop %v1951
    %v1966 = vtanh.pop %v1952
    %v1967 = vtanh.pop %v1953
    %v1968 = vtanh.pop %v1954
    %v1969 = vtanh.pop %v1955
    %v1970 = vtanh.pop %v1956
    %v1971 = vtanh.pop %v1957
    %v1972 = vtanh.pop %v1958
    %v1973 = vtanh.pop %v1959
    %v1974 = vtanh.pop %v1960
    %v1975 = vtanh.pop %v1961
    %v1976 = vtanh.pop %v1962
    %v1977 = vtanh.pop %v1963
    %1978 = vst [vmem:[%s7] sm:$0xff] %v1964
    %1979 = vst [vmem:[%s7 + $0x8] sm:$0xff] %v1965
    %1980 = vst [vmem:[%s7 + $0x10] sm:$0xff] %v1966
    %1981 = vst [vmem:[%s7 + $0x18] sm:$0xff] %v1967
    %1982 = vst [vmem:[%s7 + $0x20] sm:$0xff] %v1968
    %1983 = vst [vmem:[%s7 + $0x28] sm:$0xff] %v1969
    %1984 = vst [vmem:[%s7 + $0x30] sm:$0xff] %v1970
    %1985 = vst [vmem:[%s7 + $0x38] sm:$0xff] %v1971
    %1986 = vst [vmem:[%s7 + $0x40] sm:$0xff] %v1972
    %1987 = vst [vmem:[%s7 + $0x48] sm:$0xff] %v1973
    %1988 = vst [vmem:[%s7 + $0x50] sm:$0xff] %v1974
    %1989 = vst [vmem:[%s7 + $0x58] sm:$0xff] %v1975
    %1990 = vst [vmem:[%s7 + $0x60] sm:$0xff] %v1976
    %1991 = vst [vmem:[%s7 + $0x68] sm:$0xff] %v1977
    // Predicated region
    $region42: #{generator_forward.1} parent=1 // pred_check
      _
    $region43: #{generator_forward.1} parent=1 // pred_check_branch
      %1993 = sbr.rel (0) target = $region45
    $region44: #{generator_forward.1} parent=1 // pred_region
      _
    $region45: #{generator_forward.1} parent=1 // pred_fallthru
      _
    // Predicated region
    $region46: #{generator_forward.1} parent=1 // pred_check
      _
    $region47: #{generator_forward.1} parent=1 // pred_check_branch
      %1995 = sbr.rel (0) target = $region49
    $region48: #{generator_forward.1} parent=1 // pred_region
      _
    $region49: #{generator_forward.1} parent=1 // pred_fallthru
      _
    %1996 = vsyncpa [#allocation3], 1
    %1997 = vsyncpa [#allocation5], 1

</llo_original>
